<compile_context>
chip_gen: v7x
topology: tpu7x:2x2x1
jax: 0.10.0
libtpu: 0.0.40
codegen_flags: <defaults>
</compile_context>

<pallas_src>
import math
from functools import partial

import jax
import jax.numpy as jnp
from jax.experimental import pallas as pl
from jax.experimental.pallas import tpu as pltpu


# ----------------------------------------------------------------------------
# Fused MHA kernel: one grid step = one batch element (all heads)
# ----------------------------------------------------------------------------
def _fused_mha_kernel(x_ref, wqkv_ref, bqkv_ref, wout_ref, bout_ref, o_ref,
                      *, num_heads, head_dim, scale):
    E = num_heads * head_dim
    x = x_ref[0]                                          # (L, E)

    # --- fused qkv projection (weights pre-transposed in the wrapper) -------
    qkv = jnp.dot(x, wqkv_ref[...], preferred_element_type=jnp.float32)
    qkv = qkv + bqkv_ref[...]                             # (L, 3E)

    q = qkv[:, 0:E] * scale                               # pre-scale q (cheap)
    k = qkv[:, E:2 * E]
    v = qkv[:, 2 * E:3 * E]

    # --- all H heads per grid step: H back-to-back MXU matmuls --------------
    ctx_heads = []
    for h in range(num_heads):                            # static unroll
        lo = h * head_dim
        hi = lo + head_dim
        qh = q[:, lo:hi]                                  # (L, hd)
        kh = k[:, lo:hi]                                  # (L, hd)
        vh = v[:, lo:hi]                                  # (L, hd)

        # QK^T via dot_general contracting on hd of both sides (no .T / XLU).
        s = jax.lax.dot_general(qh, kh, (((1,), (1,)), ((), ())),
                                preferred_element_type=jnp.float32)  # (L, L)
        s = s - jnp.max(s, axis=-1, keepdims=True)        # f32 softmax stats
        p = jnp.exp(s)
        # divide -> EUP reciprocal in an otherwise idle slot
        p = p * pl.reciprocal(jnp.sum(p, axis=-1, keepdims=True), approx=True)
        ctx_heads.append(jnp.dot(p, vh, preferred_element_type=jnp.float32))

    ctx = jnp.concatenate(ctx_heads, axis=-1)             # (L, E) lane-dense

    # --- out projection fused in the same kernel (no HBM round trip) --------
    out = jnp.dot(ctx, wout_ref[...], preferred_element_type=jnp.float32)
    o_ref[0] = (out + bout_ref[...]).astype(o_ref.dtype)


# ----------------------------------------------------------------------------
# Wrapper reproducing F.multi_head_attention_forward (self-attn, no masks)
# ----------------------------------------------------------------------------
def pyt_mha_forward(query, wqkv, bqkv, wout, bout, num_heads):
    # query: (L, B, E)  — PyTorch seq-first convention
    L, B, E = query.shape
    H = num_heads
    hd = E // H
    scale = 1.0 / math.sqrt(hd)

    # single cheap layout pass outside the kernel (batch-first), weights
    # transposed once so the kernel never transposes anything.
    xb = jnp.transpose(query, (1, 0, 2))                  # (B, L, E)
    wqkv_t = wqkv.T                                       # (E, 3E)
    wout_t = wout.T                                       # (E, E)

    out_b = pl.pallas_call(
        partial(_fused_mha_kernel, num_heads=H, head_dim=hd, scale=scale),
        out_shape=jax.ShapeDtypeStruct((B, L, E), jnp.float32),
        grid=(B,),
        in_specs=[
            pl.BlockSpec((1, L, E), lambda b: (b, 0, 0)),        # activations
            pl.BlockSpec((E, 3 * E), lambda b: (0, 0)),          # W_qkv^T (resident)
            pl.BlockSpec((1, 3 * E), lambda b: (0, 0)),          # b_qkv
            pl.BlockSpec((E, E), lambda b: (0, 0)),              # W_out^T (resident)
            pl.BlockSpec((1, E), lambda b: (0, 0)),              # b_out
        ],
        out_specs=pl.BlockSpec((1, L, E), lambda b: (b, 0, 0)),  # (L, E) slab / batch
        compiler_params=pltpu.CompilerParams(
            dimension_semantics=("parallel",)),                  # shard over TCs (v7x)
    )(xb, wqkv_t, bqkv.reshape(1, 3 * E), wout_t, bout.reshape(1, E))

    # back to PyTorch's (L, B, E); need_weights=False -> weights are None
    return jnp.transpose(out_b, (1, 0, 2)), None


# ----------------------------------------------------------------------------
# Pure-JAX reference (for correctness check)
# ----------------------------------------------------------------------------
def reference_mha(query, wqkv, bqkv, wout, bout, num_heads):
    L, B, E = query.shape
    H = num_heads
    hd = E // H
    qkv = query @ wqkv.T + bqkv
    q, k, v = jnp.split(qkv, 3, axis=-1)
    q = q * (1.0 / math.sqrt(hd))

    def to_heads(t):
        return t.reshape(L, B, H, hd).transpose(1, 2, 0, 3)

    qh, kh, vh = to_heads(q), to_heads(k), to_heads(v)
    s = jnp.einsum('bhld,bhmd->bhlm', qh, kh)
    p = jax.nn.softmax(s, axis=-1)
    ctx = jnp.einsum('bhlm,bhmd->bhld', p, vh)
    ctx = ctx.transpose(2, 0, 1, 3).reshape(L, B, E)
    return ctx @ wout.T + bout


# ----------------------------------------------------------------------------
# Deterministic parameter init (mirrors PytMultiheadAttention.reset_parameters)
# ----------------------------------------------------------------------------
def init_params(key, embed_dim):
    E = embed_dim
    kq, kk, kv, kb, ko = jax.random.split(key, 5)

    def xavier_uniform(k, shape, gain):
        fan_out, fan_in = shape
        a = gain * math.sqrt(6.0 / (fan_in + fan_out))
        return jax.random.uniform(k, shape, jnp.float32, -a, a)

    g = 1.0 / math.sqrt(2.0)
    wq = xavier_uniform(kq, (E, E), g)
    wk = xavier_uniform(kk, (E, E), g)
    wv = xavier_uniform(kv, (E, E), g)
    wqkv = jnp.concatenate([wq, wk, wv], axis=0)                  # (3E, E)
    # qkv bias keeps nn.Linear default init (uniform(-1/sqrt(E), 1/sqrt(E)))
    bound = 1.0 / math.sqrt(E)
    bqkv = jax.random.uniform(kb, (3 * E,), jnp.float32, -bound, bound)
    wout = xavier_uniform(ko, (E, E), 1.0)                        # (E, E)
    bout = jnp.zeros((E,), jnp.float32)                           # zeros
    return wqkv, bqkv, wout, bout


if __name__ == "__main__":
    # small shapes consistent with the module: seq=16, batch=2, embed=32, heads=4
    L, B, E, H = 16, 2, 32, 4

    key = jax.random.PRNGKey(0)
    kx, kp = jax.random.split(key)
    x = jax.random.normal(kx, (L, B, E), dtype=jnp.float32)       # (seq, batch, embed)
    wqkv, bqkv, wout, bout = init_params(kp, E)

    out, attn_w = pyt_mha_forward(x, wqkv, bqkv, wout, bout, H)
    out = jax.block_until_ready(out)

    ref = reference_mha(x, wqkv, bqkv, wout, bout, H)
    assert out.shape == (L, B, E)
    assert attn_w is None
    # tolerance slightly loosened for the approximate EUP reciprocal in softmax
    assert jnp.allclose(out, ref, atol=2e-3, rtol=2e-3), "mismatch vs reference"

    print("KERNEL_OK")
</pallas_src>

<mosaic_0001>
module attributes {stable_mosaic.version = 11 : i64} {
  func.func @_fused_mha_kernel(%arg0: i32, %arg1: memref<1x16x32xf32, #tpu.memory_space<vmem>>, %arg2: memref<32x96xf32, #tpu.memory_space<vmem>>, %arg3: memref<1x96xf32, #tpu.memory_space<vmem>>, %arg4: memref<32x32xf32, #tpu.memory_space<vmem>>, %arg5: memref<1x32xf32, #tpu.memory_space<vmem>>, %arg6: memref<1x16x32xf32, #tpu.memory_space<vmem>>) attributes {dimension_semantics = [#tpu.dimension_semantics<parallel>], iteration_bounds = array<i64: 2>, scalar_prefetch = 0 : i64, scratch_operands = 0 : i64, tpu.core_type = #tpu.core_type<tc>, window_params = [{transform_indices = @transform_0, window_bounds = array<i64: 1, 16, 32>}, {pipeline_mode = #tpu.pipeline_mode<synchronous>, transform_indices = @transform_1, window_bounds = array<i64: 32, 96>}, {pipeline_mode = #tpu.pipeline_mode<synchronous>, transform_indices = @transform_2, window_bounds = array<i64: 1, 96>}, {pipeline_mode = #tpu.pipeline_mode<synchronous>, transform_indices = @transform_3, window_bounds = array<i64: 32, 32>}, {pipeline_mode = #tpu.pipeline_mode<synchronous>, transform_indices = @transform_4, window_bounds = array<i64: 1, 32>}, {transform_indices = @transform_5, window_bounds = array<i64: 1, 16, 32>}]} {
    %c0 = arith.constant 0 : index
    %c0_0 = arith.constant 0 : index
    %c0_1 = arith.constant 0 : index
    %0 = vector.load %arg1[%c0, %c0_0, %c0_1] : memref<1x16x32xf32, #tpu.memory_space<vmem>>, vector<1x16x32xf32>
    %1 = vector.shape_cast %0 : vector<1x16x32xf32> to vector<16x32xf32>
    %c0_2 = arith.constant 0 : index
    %c0_3 = arith.constant 0 : index
    %2 = vector.load %arg2[%c0_2, %c0_3] : memref<32x96xf32, #tpu.memory_space<vmem>>, vector<32x96xf32>
    %cst = arith.constant dense<0.000000e+00> : vector<16x96xf32>
    %3 = tpu.matmul %1, %2, %cst {dimension_numbers = #tpu.dot_dimension_numbers<[1], [0], [0], [1], [0, 0, 1, 1], [], []>} : vector<16x32xf32>, vector<32x96xf32>, vector<16x96xf32> -> vector<16x96xf32>
    %c0_4 = arith.constant 0 : index
    %c0_5 = arith.constant 0 : index
    %4 = vector.load %arg3[%c0_4, %c0_5] : memref<1x96xf32, #tpu.memory_space<vmem>>, vector<1x96xf32>
    %5 = vector.broadcast %4 : vector<1x96xf32> to vector<16x96xf32>
    %6 = arith.addf %3, %5 : vector<16x96xf32>
    %7 = vector.extract_strided_slice %6 {offsets = [0, 0], sizes = [16, 32], strides = [1, 1]} : vector<16x96xf32> to vector<16x32xf32>
    %cst_6 = arith.constant 0.353553385 : f32
    %8 = vector.broadcast %cst_6 : f32 to vector<16x32xf32>
    %9 = arith.mulf %7, %8 : vector<16x32xf32>
    %10 = vector.extract_strided_slice %6 {offsets = [0, 32], sizes = [16, 32], strides = [1, 1]} : vector<16x96xf32> to vector<16x32xf32>
    %11 = vector.extract_strided_slice %6 {offsets = [0, 64], sizes = [16, 32], strides = [1, 1]} : vector<16x96xf32> to vector<16x32xf32>
    %12 = vector.extract_strided_slice %9 {offsets = [0, 0], sizes = [16, 8], strides = [1, 1]} : vector<16x32xf32> to vector<16x8xf32>
    %13 = vector.extract_strided_slice %10 {offsets = [0, 0], sizes = [16, 8], strides = [1, 1]} : vector<16x32xf32> to vector<16x8xf32>
    %14 = vector.extract_strided_slice %11 {offsets = [0, 0], sizes = [16, 8], strides = [1, 1]} : vector<16x32xf32> to vector<16x8xf32>
    %cst_7 = arith.constant dense<0.000000e+00> : vector<16x16xf32>
    %15 = tpu.matmul %12, %13, %cst_7 {dimension_numbers = #tpu.dot_dimension_numbers<[1], [1], [0], [0], [0, 0, 1, 0], [], []>} : vector<16x8xf32>, vector<16x8xf32>, vector<16x16xf32> -> vector<16x16xf32>
    %cst_8 = arith.constant dense<0xFF800000> : vector<16xf32>
    %16 = vector.multi_reduction <maximumf>, %15, %cst_8 [1] : vector<16x16xf32> to vector<16xf32>
    %17 = vector.shape_cast %16 : vector<16xf32> to vector<16x1xf32>
    %18 = vector.broadcast %17 : vector<16x1xf32> to vector<16x16xf32>
    %19 = arith.subf %15, %18 : vector<16x16xf32>
    %20 = math.exp %19 : vector<16x16xf32>
    %cst_9 = arith.constant dense<0.000000e+00> : vector<16xf32>
    %21 = vector.multi_reduction <add>, %20, %cst_9 [1] : vector<16x16xf32> to vector<16xf32>
    %22 = vector.shape_cast %21 : vector<16xf32> to vector<16x1xf32>
    %23 = tpu.reciprocal %22 {approx = true} : vector<16x1xf32> -> vector<16x1xf32>
    %24 = vector.broadcast %23 : vector<16x1xf32> to vector<16x16xf32>
    %25 = arith.mulf %20, %24 : vector<16x16xf32>
    %cst_10 = arith.constant dense<0.000000e+00> : vector<16x8xf32>
    %26 = tpu.matmul %25, %14, %cst_10 {dimension_numbers = #tpu.dot_dimension_numbers<[1], [0], [0], [1], [0, 0, 1, 1], [], []>} : vector<16x16xf32>, vector<16x8xf32>, vector<16x8xf32> -> vector<16x8xf32>
    %27 = vector.extract_strided_slice %9 {offsets = [0, 8], sizes = [16, 8], strides = [1, 1]} : vector<16x32xf32> to vector<16x8xf32>
    %28 = vector.extract_strided_slice %10 {offsets = [0, 8], sizes = [16, 8], strides = [1, 1]} : vector<16x32xf32> to vector<16x8xf32>
    %29 = vector.extract_strided_slice %11 {offsets = [0, 8], sizes = [16, 8], strides = [1, 1]} : vector<16x32xf32> to vector<16x8xf32>
    %cst_11 = arith.constant dense<0.000000e+00> : vector<16x16xf32>
    %30 = tpu.matmul %27, %28, %cst_11 {dimension_numbers = #tpu.dot_dimension_numbers<[1], [1], [0], [0], [0, 0, 1, 0], [], []>} : vector<16x8xf32>, vector<16x8xf32>, vector<16x16xf32> -> vector<16x16xf32>
    %cst_12 = arith.constant dense<0xFF800000> : vector<16xf32>
    %31 = vector.multi_reduction <maximumf>, %30, %cst_12 [1] : vector<16x16xf32> to vector<16xf32>
    %32 = vector.shape_cast %31 : vector<16xf32> to vector<16x1xf32>
    %33 = vector.broadcast %32 : vector<16x1xf32> to vector<16x16xf32>
    %34 = arith.subf %30, %33 : vector<16x16xf32>
    %35 = math.exp %34 : vector<16x16xf32>
    %cst_13 = arith.constant dense<0.000000e+00> : vector<16xf32>
    %36 = vector.multi_reduction <add>, %35, %cst_13 [1] : vector<16x16xf32> to vector<16xf32>
    %37 = vector.shape_cast %36 : vector<16xf32> to vector<16x1xf32>
    %38 = tpu.reciprocal %37 {approx = true} : vector<16x1xf32> -> vector<16x1xf32>
    %39 = vector.broadcast %38 : vector<16x1xf32> to vector<16x16xf32>
    %40 = arith.mulf %35, %39 : vector<16x16xf32>
    %cst_14 = arith.constant dense<0.000000e+00> : vector<16x8xf32>
    %41 = tpu.matmul %40, %29, %cst_14 {dimension_numbers = #tpu.dot_dimension_numbers<[1], [0], [0], [1], [0, 0, 1, 1], [], []>} : vector<16x16xf32>, vector<16x8xf32>, vector<16x8xf32> -> vector<16x8xf32>
    %42 = vector.extract_strided_slice %9 {offsets = [0, 16], sizes = [16, 8], strides = [1, 1]} : vector<16x32xf32> to vector<16x8xf32>
    %43 = vector.extract_strided_slice %10 {offsets = [0, 16], sizes = [16, 8], strides = [1, 1]} : vector<16x32xf32> to vector<16x8xf32>
    %44 = vector.extract_strided_slice %11 {offsets = [0, 16], sizes = [16, 8], strides = [1, 1]} : vector<16x32xf32> to vector<16x8xf32>
    %cst_15 = arith.constant dense<0.000000e+00> : vector<16x16xf32>
    %45 = tpu.matmul %42, %43, %cst_15 {dimension_numbers = #tpu.dot_dimension_numbers<[1], [1], [0], [0], [0, 0, 1, 0], [], []>} : vector<16x8xf32>, vector<16x8xf32>, vector<16x16xf32> -> vector<16x16xf32>
    %cst_16 = arith.constant dense<0xFF800000> : vector<16xf32>
    %46 = vector.multi_reduction <maximumf>, %45, %cst_16 [1] : vector<16x16xf32> to vector<16xf32>
    %47 = vector.shape_cast %46 : vector<16xf32> to vector<16x1xf32>
    %48 = vector.broadcast %47 : vector<16x1xf32> to vector<16x16xf32>
    %49 = arith.subf %45, %48 : vector<16x16xf32>
    %50 = math.exp %49 : vector<16x16xf32>
    %cst_17 = arith.constant dense<0.000000e+00> : vector<16xf32>
    %51 = vector.multi_reduction <add>, %50, %cst_17 [1] : vector<16x16xf32> to vector<16xf32>
    %52 = vector.shape_cast %51 : vector<16xf32> to vector<16x1xf32>
    %53 = tpu.reciprocal %52 {approx = true} : vector<16x1xf32> -> vector<16x1xf32>
    %54 = vector.broadcast %53 : vector<16x1xf32> to vector<16x16xf32>
    %55 = arith.mulf %50, %54 : vector<16x16xf32>
    %cst_18 = arith.constant dense<0.000000e+00> : vector<16x8xf32>
    %56 = tpu.matmul %55, %44, %cst_18 {dimension_numbers = #tpu.dot_dimension_numbers<[1], [0], [0], [1], [0, 0, 1, 1], [], []>} : vector<16x16xf32>, vector<16x8xf32>, vector<16x8xf32> -> vector<16x8xf32>
    %57 = vector.extract_strided_slice %9 {offsets = [0, 24], sizes = [16, 8], strides = [1, 1]} : vector<16x32xf32> to vector<16x8xf32>
    %58 = vector.extract_strided_slice %10 {offsets = [0, 24], sizes = [16, 8], strides = [1, 1]} : vector<16x32xf32> to vector<16x8xf32>
    %59 = vector.extract_strided_slice %11 {offsets = [0, 24], sizes = [16, 8], strides = [1, 1]} : vector<16x32xf32> to vector<16x8xf32>
    %cst_19 = arith.constant dense<0.000000e+00> : vector<16x16xf32>
    %60 = tpu.matmul %57, %58, %cst_19 {dimension_numbers = #tpu.dot_dimension_numbers<[1], [1], [0], [0], [0, 0, 1, 0], [], []>} : vector<16x8xf32>, vector<16x8xf32>, vector<16x16xf32> -> vector<16x16xf32>
    %cst_20 = arith.constant dense<0xFF800000> : vector<16xf32>
    %61 = vector.multi_reduction <maximumf>, %60, %cst_20 [1] : vector<16x16xf32> to vector<16xf32>
    %62 = vector.shape_cast %61 : vector<16xf32> to vector<16x1xf32>
    %63 = vector.broadcast %62 : vector<16x1xf32> to vector<16x16xf32>
    %64 = arith.subf %60, %63 : vector<16x16xf32>
    %65 = math.exp %64 : vector<16x16xf32>
    %cst_21 = arith.constant dense<0.000000e+00> : vector<16xf32>
    %66 = vector.multi_reduction <add>, %65, %cst_21 [1] : vector<16x16xf32> to vector<16xf32>
    %67 = vector.shape_cast %66 : vector<16xf32> to vector<16x1xf32>
    %68 = tpu.reciprocal %67 {approx = true} : vector<16x1xf32> -> vector<16x1xf32>
    %69 = vector.broadcast %68 : vector<16x1xf32> to vector<16x16xf32>
    %70 = arith.mulf %65, %69 : vector<16x16xf32>
    %cst_22 = arith.constant dense<0.000000e+00> : vector<16x8xf32>
    %71 = tpu.matmul %70, %59, %cst_22 {dimension_numbers = #tpu.dot_dimension_numbers<[1], [0], [0], [1], [0, 0, 1, 1], [], []>} : vector<16x16xf32>, vector<16x8xf32>, vector<16x8xf32> -> vector<16x8xf32>
    %72 = tpu.concatenate %26, %41, %56, %71 in 1 : vector<16x8xf32>, vector<16x8xf32>, vector<16x8xf32>, vector<16x8xf32> -> vector<16x32xf32>
    %c0_23 = arith.constant 0 : index
    %c0_24 = arith.constant 0 : index
    %73 = vector.load %arg4[%c0_23, %c0_24] : memref<32x32xf32, #tpu.memory_space<vmem>>, vector<32x32xf32>
    %cst_25 = arith.constant dense<0.000000e+00> : vector<16x32xf32>
    %74 = tpu.matmul %72, %73, %cst_25 {dimension_numbers = #tpu.dot_dimension_numbers<[1], [0], [0], [1], [0, 0, 1, 1], [], []>} : vector<16x32xf32>, vector<32x32xf32>, vector<16x32xf32> -> vector<16x32xf32>
    %c0_26 = arith.constant 0 : index
    %c0_27 = arith.constant 0 : index
    %75 = vector.load %arg5[%c0_26, %c0_27] : memref<1x32xf32, #tpu.memory_space<vmem>>, vector<1x32xf32>
    %76 = vector.broadcast %75 : vector<1x32xf32> to vector<16x32xf32>
    %77 = arith.addf %74, %76 : vector<16x32xf32>
    %c0_28 = arith.constant 0 : index
    %c0_29 = arith.constant 0 : index
    %c0_30 = arith.constant 0 : index
    %78 = vector.load %arg6[%c0_28, %c0_29, %c0_30] : memref<1x16x32xf32, #tpu.memory_space<vmem>>, vector<1x16x32xf32>
    %79 = vector.shape_cast %78 : vector<1x16x32xf32> to vector<16x32xf32>
    %80 = vector.shape_cast %77 : vector<16x32xf32> to vector<1x16x32xf32>
    tpu.vector_store %arg6[%c0_28, %c0_29, %c0_30], %80 {strides = array<i32>} : memref<1x16x32xf32, #tpu.memory_space<vmem>>, vector<1x16x32xf32>,
    return
  }
  func.func @transform_0(%arg0: i32) -> (i32, i32, i32) {
    %c0_i32 = arith.constant 0 : i32
    %c0_i32_0 = arith.constant 0 : i32
    %c0_i32_1 = arith.constant 0 : i32
    return %arg0, %c0_i32, %c0_i32_0 : i32, i32, i32
  }
  func.func @transform_1(%arg0: i32) -> (i32, i32) {
    %c0_i32 = arith.constant 0 : i32
    %c0_i32_0 = arith.constant 0 : i32
    %c0_i32_1 = arith.constant 0 : i32
    return %c0_i32, %c0_i32_0 : i32, i32
  }
  func.func @transform_2(%arg0: i32) -> (i32, i32) {
    %c0_i32 = arith.constant 0 : i32
    %c0_i32_0 = arith.constant 0 : i32
    %c0_i32_1 = arith.constant 0 : i32
    return %c0_i32, %c0_i32_0 : i32, i32
  }
  func.func @transform_3(%arg0: i32) -> (i32, i32) {
    %c0_i32 = arith.constant 0 : i32
    %c0_i32_0 = arith.constant 0 : i32
    %c0_i32_1 = arith.constant 0 : i32
    return %c0_i32, %c0_i32_0 : i32, i32
  }
  func.func @transform_4(%arg0: i32) -> (i32, i32) {
    %c0_i32 = arith.constant 0 : i32
    %c0_i32_0 = arith.constant 0 : i32
    %c0_i32_1 = arith.constant 0 : i32
    return %c0_i32, %c0_i32_0 : i32, i32
  }
  func.func @transform_5(%arg0: i32) -> (i32, i32, i32) {
    %c0_i32 = arith.constant 0 : i32
    %c0_i32_0 = arith.constant 0 : i32
    %c0_i32_1 = arith.constant 0 : i32
    return %arg0, %c0_i32, %c0_i32_0 : i32, i32, i32
  }
}

</mosaic_0001>

<llo_original>
// kernel: tpu_custom_call.1
$region0: #{tpu_custom_call.1}
  #allocation0 [shape = 'u32[]', space=smem, size = 0x4, offset = 0x4, fixed_abs, tag = 'smem constant byte address 0x4 - core index']
  #allocation1 [shape = 'u32[144,128]{1,0:T(1,128)}', space=vmem, size = 0x12000, scoped, tag = 'internal scratch']
  %s0 = inlined_call_operand.hbm [shape: f32[2,16,32], index: 0, kind: input, shape index: {}]
  %s1 = inlined_call_operand.hbm [shape: f32[32,96], index: 1, kind: input, shape index: {}]
  %s2 = inlined_call_operand.vmem [shape: f32[1,96], index: 2, kind: input, shape index: {}]
  %s3 = inlined_call_operand.hbm [shape: f32[32,32], index: 3, kind: input, shape index: {}]
  %s4 = inlined_call_operand.vmem [shape: f32[1,32], index: 4, kind: input, shape index: {}]
  %s5 = inlined_call_operand.hbm [shape: f32[2,16,32], index: 5, kind: output, shape index: {}]
  %s6 = sld [smem:[#allocation0]]
  $region65: #{tpu_custom_call.1} parent=0
    _
  %s8 = ssub.s32 1, %s6
  %s9 = scalar_select 0, %s8, %s6
  $region1: #{tpu_custom_call.1} parent=0
    #allocation2 [shape = 'u8[16384]{0}', space=vmem, size = 0x4000, scoped, tag = 'input window, operand 0']
    #allocation3 [shape = 's32[2]{0}', space=sflag, size = 0x8, scoped, tag = 'scoped memory for tpu_custom_call.1']
    #allocation4 [shape = 's32[2]{0}', space=sflag, size = 0x8, scoped, tag = 'scoped memory for tpu_custom_call.1']
    #allocation5 [shape = 'u8[16384]{0}', space=vmem, size = 0x4000, scoped, tag = 'input window, operand 1, single buffered']
    #allocation6 [shape = 's32[1]{0}', space=sflag, size = 0x4, scoped, tag = 'scoped memory for tpu_custom_call.1']
    #allocation7 [shape = 'u8[16384]{0}', space=vmem, size = 0x4000, scoped, tag = 'input window, operand 3, single buffered']
    #allocation8 [shape = 'u8[16384]{0}', space=vmem, size = 0x4000, scoped, tag = 'output window, operand 0']
    %10 = vsyncpa [#allocation3], 0
    %s11 = scalar_lea.sflag [#allocation3], 1
    %12 = vsyncpa %s11, 0
    %13 = vsyncpa [#allocation6], 0
    %14 = vsyncpa [#allocation4], 0
    %s15 = scalar_lea.sflag [#allocation4], 1
    %16 = vsyncpa %s15, 0
    loop: start=0, step=1, limit=4
    $region2: #{tpu_custom_call.1} parent=1 // loop_pre_header
      _
    $region3: #{tpu_custom_call.1} parent=1 // loop_header
      %s18 = sphi 0, %s22
      %p19 = scmp.ge.s32.totalorder %s18, 4
      %s28 = sphi 0, %s30
      %s31 = sphi 0, %s28
      %s32 = sphi 0, %s31
      %s48 = sphi 0, %s32
      %s52 = sphi 0, %s52
      %s54 = sphi 0, %s52
      %s55 = sphi 0, %s54
      %s69 = sphi 0, %s55
      %s73 = sphi 0, %s73
      %s75 = sphi 0, %s73
      %s76 = sphi 0, %s75
      %s90 = sphi 0, %s76
      %s94 = sphi 0, %s94
      %s96 = sphi 0, %s94
      %s97 = sphi 0, %s96
      %s111 = sphi 0, %s97
      %s115 = sphi 0, %s115
      %s117 = sphi 0, %s115
      %s118 = sphi 0, %s117
      %s132 = sphi 0, %s118
      %s138 = sphi 0, %s140
      %s141 = sphi 0, %s138
      %s142 = sphi 0, %s141
      %s158 = sphi 0, %s142
    $region4: #{tpu_custom_call.1} parent=1 // loop_header_branch
      %21 = sbr.rel (%p19) target = $region8
    $region5: #{tpu_custom_call.1} parent=1 // loop_body
      %s23 = ssub.s32 %s18, 1
      %s24 = ssub.s32 %s18, 2
      %s25 = sadd.s32 %s18, 1
      %s26 = ssub.s32 %s18, %s25
      %p27 = scmp.eq.s32.totalorder %s26, 0
      %s29 = sadd.s32 %s28, 1
      %s30 = scalar_select %p27, %s28, %s29
      %p33 = pneg %p27
      %p34 = scmp.eq.s32.totalorder %s18, 1
      %p35 = por %p33, %p34
      %p36 = scmp.ne.s32.totalorder %s28, %s31
      %p37 = scmp.eq.s32.totalorder %s18, 0
      %p38 = por %p36, %p37
      %p39 = scmp.ne.s32.totalorder %s28, %s31
      %p40 = scmp.eq.s32.totalorder %s23, 1
      %p41 = por %p39, %p40
      %p42 = scmp.ne.s32.totalorder %s31, %s32
      %p43 = scmp.eq.s32.totalorder %s23, 0
      %p44 = por %p42, %p43
      %p45 = scmp.ne.s32.totalorder %s31, %s32
      %p46 = scmp.eq.s32.totalorder %s24, 1
      %p47 = por %p45, %p46
      %p49 = scmp.ne.s32.totalorder %s32, %s48
      %p50 = scmp.eq.s32.totalorder %s24, 0
      %p51 = por %p49, %p50
      %s53 = sadd.s32 %s52, 1
      %p56 = scmp.eq.s32.totalorder %s18, 1
      %p57 = scmp.ne.s32.totalorder %s52, %s54
      %p58 = scmp.eq.s32.totalorder %s18, 0
      %p59 = por %p57, %p58
      %p60 = scmp.ne.s32.totalorder %s52, %s54
      %p61 = scmp.eq.s32.totalorder %s23, 1
      %p62 = por %p60, %p61
      %p63 = scmp.ne.s32.totalorder %s54, %s55
      %p64 = scmp.eq.s32.totalorder %s23, 0
      %p65 = por %p63, %p64
      %p66 = scmp.ne.s32.totalorder %s54, %s55
      %p67 = scmp.eq.s32.totalorder %s24, 1
      %p68 = por %p66, %p67
      %p70 = scmp.ne.s32.totalorder %s55, %s69
      %p71 = scmp.eq.s32.totalorder %s24, 0
      %p72 = por %p70, %p71
      %s74 = sadd.s32 %s73, 1
      %p77 = scmp.eq.s32.totalorder %s18, 1
      %p78 = scmp.ne.s32.totalorder %s73, %s75
      %p79 = scmp.eq.s32.totalorder %s18, 0
      %p80 = por %p78, %p79
      %p81 = scmp.ne.s32.totalorder %s73, %s75
      %p82 = scmp.eq.s32.totalorder %s23, 1
      %p83 = por %p81, %p82
      %p84 = scmp.ne.s32.totalorder %s75, %s76
      %p85 = scmp.eq.s32.totalorder %s23, 0
      %p86 = por %p84, %p85
      %p87 = scmp.ne.s32.totalorder %s75, %s76
      %p88 = scmp.eq.s32.totalorder %s24, 1
      %p89 = por %p87, %p88
      %p91 = scmp.ne.s32.totalorder %s76, %s90
      %p92 = scmp.eq.s32.totalorder %s24, 0
      %p93 = por %p91, %p92
      %s95 = sadd.s32 %s94, 1
      %p98 = scmp.eq.s32.totalorder %s18, 1
      %p99 = scmp.ne.s32.totalorder %s94, %s96
      %p100 = scmp.eq.s32.totalorder %s18, 0
      %p101 = por %p99, %p100
      %p102 = scmp.ne.s32.totalorder %s94, %s96
      %p103 = scmp.eq.s32.totalorder %s23, 1
      %p104 = por %p102, %p103
      %p105 = scmp.ne.s32.totalorder %s96, %s97
      %p106 = scmp.eq.s32.totalorder %s23, 0
      %p107 = por %p105, %p106
      %p108 = scmp.ne.s32.totalorder %s96, %s97
      %p109 = scmp.eq.s32.totalorder %s24, 1
      %p110 = por %p108, %p109
      %p112 = scmp.ne.s32.totalorder %s97, %s111
      %p113 = scmp.eq.s32.totalorder %s24, 0
      %p114 = por %p112, %p113
      %s116 = sadd.s32 %s115, 1
      %p119 = scmp.eq.s32.totalorder %s18, 1
      %p120 = scmp.ne.s32.totalorder %s115, %s117
      %p121 = scmp.eq.s32.totalorder %s18, 0
      %p122 = por %p120, %p121
      %p123 = scmp.ne.s32.totalorder %s115, %s117
      %p124 = scmp.eq.s32.totalorder %s23, 1
      %p125 = por %p123, %p124
      %p126 = scmp.ne.s32.totalorder %s117, %s118
      %p127 = scmp.eq.s32.totalorder %s23, 0
      %p128 = por %p126, %p127
      %p129 = scmp.ne.s32.totalorder %s117, %s118
      %p130 = scmp.eq.s32.totalorder %s24, 1
      %p131 = por %p129, %p130
      %p133 = scmp.ne.s32.totalorder %s118, %s132
      %p134 = scmp.eq.s32.totalorder %s24, 0
      %p135 = por %p133, %p134
      %s136 = ssub.s32 %s18, %s25
      %p137 = scmp.eq.s32.totalorder %s136, 0
      %s139 = sadd.s32 %s138, 1
      %s140 = scalar_select %p137, %s138, %s139
      %p143 = pneg %p137
      %p144 = scmp.eq.s32.totalorder %s18, 1
      %p145 = por %p143, %p144
      %p146 = scmp.ne.s32.totalorder %s138, %s141
      %p147 = scmp.eq.s32.totalorder %s18, 0
      %p148 = por %p146, %p147
      %p149 = scmp.ne.s32.totalorder %s138, %s141
      %p150 = scmp.eq.s32.totalorder %s23, 1
      %p151 = por %p149, %p150
      %p152 = scmp.ne.s32.totalorder %s141, %s142
      %p153 = scmp.eq.s32.totalorder %s23, 0
      %p154 = por %p152, %p153
      %p155 = scmp.ne.s32.totalorder %s141, %s142
      %p156 = scmp.eq.s32.totalorder %s24, 1
      %p157 = por %p155, %p156
      %p159 = scmp.ne.s32.totalorder %s142, %s158
      %p160 = scmp.eq.s32.totalorder %s24, 0
      %p161 = por %p159, %p160
      %p162 = scmp.le.s32.totalorder 1, %s18
      %p163 = scmp.lt.s32.totalorder %s18, 3
      %p164 = pnand %p162, %p163
      %p165 = pneg %p164
      // Predicated region
      $region9: #{tpu_custom_call.1} parent=5 // pred_check
        _
      $region10: #{tpu_custom_call.1} parent=5 // pred_check_branch
        %167 = sbr.rel (%p164) target = $region12
      $region11: #{tpu_custom_call.1} parent=5 // pred_region
        %s168 = ssub.s32 %s18, 1
        // Predicated region
        $region13: #{tpu_custom_call.1} parent=11 // pred_check
          %p169 = pneg %p65
        $region14: #{tpu_custom_call.1} parent=11 // pred_check_branch
          %171 = sbr.rel (%p169) target = $region16
        $region15: #{tpu_custom_call.1} parent=11 // pred_region
          %s173 = ssub.s32 512, 512
          %174 = vsyncadd [#allocation6], %s173
          %s175 = sshll.u32 [#allocation5], 4
          %s176 = int_to_ptr.vmem [resolvable:$true] %s175
          %181 = dma.hbm_to_vmem [thread:$0]  %s1, 512, %s176, [#allocation6], 128, 128, 8
        $region16: #{tpu_custom_call.1} parent=11 // pred_fallthru
          _
        // Predicated region
        $region17: #{tpu_custom_call.1} parent=11 // pred_check
          %p182 = pneg %p86
        $region18: #{tpu_custom_call.1} parent=11 // pred_check_branch
          %184 = sbr.rel (%p182) target = $region20
        $region19: #{tpu_custom_call.1} parent=11 // pred_region
          _
        $region20: #{tpu_custom_call.1} parent=11 // pred_fallthru
          _
        // Predicated region
        $region21: #{tpu_custom_call.1} parent=11 // pred_check
          %p185 = pneg %p107
        $region22: #{tpu_custom_call.1} parent=11 // pred_check_branch
          %187 = sbr.rel (%p185) target = $region24
        $region23: #{tpu_custom_call.1} parent=11 // pred_region
          %s189 = ssub.s32 512, 512
          %190 = vsyncadd [#allocation6], %s189
          %s191 = sshll.u32 [#allocation7], 4
          %s192 = int_to_ptr.vmem [resolvable:$true] %s191
          %197 = dma.hbm_to_vmem [thread:$0]  %s3, 512, %s192, [#allocation6], 128, 128, 8
        $region24: #{tpu_custom_call.1} parent=11 // pred_fallthru
          _
        // Predicated region
        $region25: #{tpu_custom_call.1} parent=11 // pred_check
          %p198 = pneg %p128
        $region26: #{tpu_custom_call.1} parent=11 // pred_check_branch
          %200 = sbr.rel (%p198) target = $region28
        $region27: #{tpu_custom_call.1} parent=11 // pred_region
          _
        $region28: #{tpu_custom_call.1} parent=11 // pred_fallthru
          _
      $region12: #{tpu_custom_call.1} parent=5 // pred_fallthru
        _
      %p201 = scmp.lt.s32.totalorder %s18, 2
      // Predicated region
      $region29: #{tpu_custom_call.1} parent=5 // pred_check
        %p202 = pneg %p201
      $region30: #{tpu_custom_call.1} parent=5 // pred_check_branch
        %204 = sbr.rel (%p202) target = $region32
      $region31: #{tpu_custom_call.1} parent=5 // pred_region
        // Predicated region
        $region33: #{tpu_custom_call.1} parent=31 // pred_check
          %p205 = pneg %p38
        $region34: #{tpu_custom_call.1} parent=31 // pred_check_branch
          %207 = sbr.rel (%p205) target = $region36
        $region35: #{tpu_custom_call.1} parent=31 // pred_region
          %s208 = sand.u32 %s28, 1
          %s209 = scalar_lea.sflag [#allocation3], %s208
          %s210 = sand.u32 %s28, 1
          %s211 = smul.addr %s210, 16
          %s212 = scalar_lea.vmem [#allocation2], %s211
          %s214 = ssub.s32 256, 256
          %215 = vsyncadd %s209, %s214
          %s216 = smul.addr %s18, 2
          %s217 = smul.addr %s216, 128
          %s218 = scalar_lea.hbm %s0, %s217
          %s219 = sshll.u32 %s212, 4
          %s220 = int_to_ptr.vmem [resolvable:$true] %s219
          %225 = dma.hbm_to_vmem [thread:$0]  %s218, 256, %s220, %s209, 128, 128, 8
        $region36: #{tpu_custom_call.1} parent=31 // pred_fallthru
          _
      $region32: #{tpu_custom_call.1} parent=5 // pred_fallthru
        _
      %p226 = scmp.le.s32.totalorder 1, %s18
      %p227 = scmp.lt.s32.totalorder %s18, 3
      %p228 = pnand %p226, %p227
      %p229 = pneg %p228
      // Predicated region
      $region37: #{tpu_custom_call.1} parent=5 // pred_check
        _
      $region38: #{tpu_custom_call.1} parent=5 // pred_check_branch
        %231 = sbr.rel (%p228) target = $region40
      $region39: #{tpu_custom_call.1} parent=5 // pred_region
        %s232 = ssub.s32 %s18, 1
        %s233 = sand.u32 %s31, 1
        %s234 = scalar_lea.sflag [#allocation3], %s233
        %s235 = sand.u32 %s31, 1
        %s236 = smul.addr %s235, 16
        %s237 = scalar_lea.vmem [#allocation2], %s236
        // Predicated region
        $region41: #{tpu_custom_call.1} parent=39 // pred_check
          %p238 = pneg %p44
        $region42: #{tpu_custom_call.1} parent=39 // pred_check_branch
          %240 = sbr.rel (%p238) target = $region44
        $region43: #{tpu_custom_call.1} parent=39 // pred_region
          %241 = dma.done %s234, 256
        $region44: #{tpu_custom_call.1} parent=39 // pred_fallthru
          _
        // Predicated region
        $region45: #{tpu_custom_call.1} parent=39 // pred_check
          %p242 = pneg %p65
        $region46: #{tpu_custom_call.1} parent=39 // pred_check_branch
          %244 = sbr.rel (%p242) target = $region48
        $region47: #{tpu_custom_call.1} parent=39 // pred_region
          %245 = dma.done [#allocation6], 512
        $region48: #{tpu_custom_call.1} parent=39 // pred_fallthru
          _
        // Predicated region
        $region49: #{tpu_custom_call.1} parent=39 // pred_check
          %p246 = pneg %p107
        $region50: #{tpu_custom_call.1} parent=39 // pred_check_branch
          %248 = sbr.rel (%p246) target = $region52
        $region51: #{tpu_custom_call.1} parent=39 // pred_region
          %249 = dma.done [#allocation6], 512
        $region52: #{tpu_custom_call.1} parent=39 // pred_fallthru
          _
        %s250 = sand.u32 %s31, 1
        %s251 = scalar_lea.sflag [#allocation3], %s250
        %s252 = sand.u32 %s31, 1
        %s253 = smul.addr %s252, 16
        %s254 = scalar_lea.vmem [#allocation2], %s253
        %p255 = pneg %p44
        %p256 = pneg %p41
        %p257 = pneg %p65
        %p258 = pneg %p62
        %p259 = pneg %p86
        %p260 = pneg %p83
        %p261 = pneg %p107
        %p262 = pneg %p104
        %p263 = pneg %p128
        %p264 = pneg %p125
        %p265 = pneg %p154
        %p266 = pneg %p151
        %s267 = sand.u32 %s141, 1
        %s268 = scalar_lea.sflag [#allocation4], %s267
        %s269 = sand.u32 %s141, 1
        %s270 = smul.addr %s269, 16
        %s271 = scalar_lea.vmem [#allocation8], %s270
        %v272 = vld [vmem:[%s237] sm:$0xff]
        %v273 = vld [vmem:[%s237 + $0x8] sm:$0xff]
        %v274 = vld [vmem:[#allocation5] sm:$0xff]
        %v275 = vld [vmem:[#allocation5 + $0x8] sm:$0xff]
        %v276 = vld [vmem:[#allocation5 + $0x10] sm:$0xff]
        %v277 = vld [vmem:[#allocation5 + $0x18] sm:$0xff]
        %v278 = vld [vmem:[%s2] sm:$0x1]
        %v280 = vlaneseq
        %v281 = vshrl.u32 %v280, 7
        %v282 = vsub.s32 0, %v281
        %v283 = vrot.slane %v278, %v282
        %vm285 = vcmask 261120
        %v287 = vsel %vm285, %v272, 0
        %v290 = vsel %vm285, %v273, 0
        %292 = vmatprep.subr.mxu0 0.0
        %293 = vmatpush1.msra.mxu0 %v274
        %294 = vmatprep.subr.mxu0 0.0
        %295 = vmatpush1.msra.mxu0 %v275
        %296 = vmatprep.subr.mxu0 0.0
        %297 = vmatpush1.msra.mxu0 %v276
        %298 = vmatprep.subr.mxu0 0.0
        %299 = vmatpush1.msra.mxu0 %v277
        %300 = vmatprep.subr.mxu0 0.0
        %301 = vmatpush1.msra.mxu0 0.0
        %302 = vmatprep.subr.mxu0 0.0
        %303 = vmatpush1.msra.mxu0 0.0
        %304 = vmatprep.subr.mxu0 0.0
        %305 = vmatpush1.msra.mxu0 0.0
        %306 = vmatprep.subr.mxu0 0.0
        %307 = vmatpush1.msra.mxu0 0.0
        %308 = vmatprep.subr.mxu0 0.0
        %309 = vmatpush1.msra.mxu0 0.0
        %310 = vmatprep.subr.mxu0 0.0
        %311 = vmatpush1.msra.mxu0 0.0
        %312 = vmatprep.subr.mxu0 0.0
        %313 = vmatpush1.msra.mxu0 0.0
        %314 = vmatprep.subr.mxu0 0.0
        %315 = vmatpush1.msra.mxu0 0.0
        %316 = vmatprep.subr.mxu0 0.0
        %317 = vmatpush1.msra.mxu0 0.0
        %318 = vmatprep.subr.mxu0 0.0
        %319 = vmatpush1.msra.mxu0 0.0
        %320 = vmatprep.subr.mxu0 0.0
        %321 = vmatpush1.msra.mxu0 0.0
        %322 = vmatprep.subr.mxu0 0.0
        %323 = vmatpush1.msra.mxu0 0.0
        %324 = vmatprep.subr.mxu0 0.0
        %325 = vmatpush1.msra.mxu0 0.0
        %326 = vmatprep.subr.mxu0 0.0
        %327 = vmatpush1.msra.mxu0 0.0
        %328 = vmatprep.subr.mxu0 0.0
        %329 = vmatpush1.msra.mxu0 0.0
        %330 = vmatprep.subr.mxu0 0.0
        %331 = vmatpush1.msra.mxu0 0.0
        %332 = vmatprep.subr.mxu0 0.0
        %333 = vmatpush1.msra.mxu0 0.0
        %334 = vmatprep.subr.mxu0 0.0
        %335 = vmatpush1.msra.mxu0 0.0
        %336 = vmatprep.subr.mxu0 0.0
        %337 = vmatpush1.msra.mxu0 0.0
        %338 = vmatprep.subr.mxu0 0.0
        %339 = vmatpush1.msra.mxu0 0.0
        %340 = vmatprep.subr.mxu0 0.0
        %341 = vmatpush1.msra.mxu0 0.0
        %342 = vmatprep.subr.mxu0 0.0
        %343 = vmatpush1.msra.mxu0 0.0
        %344 = vmatprep.subr.mxu0 0.0
        %345 = vmatpush1.msra.mxu0 0.0
        %346 = vmatprep.subr.mxu0 0.0
        %347 = vmatpush1.msra.mxu0 0.0
        %348 = vmatprep.subr.mxu0 0.0
        %349 = vmatpush1.msra.mxu0 0.0
        %350 = vmatprep.subr.mxu0 0.0
        %351 = vmatpush1.msra.mxu0 0.0
        %352 = vmatprep.subr.mxu0 0.0
        %353 = vmatpush1.msra.mxu0 0.0
        %354 = vmatprep.subr.mxu0 0.0
        %355 = vmatpush1.msra.mxu0 0.0
        %356 = vmatprep.mubr.f32.mxu0 0.0
        %357 = vmatmul.mubr.f32.gmra.mrb[0].mxu0 %v287
        %v358 = vpop.f32.mrb[0].mxu0
        %v359 = vadd.f32 %v283, %v358
        %v360 = vpop.f32.mrb[0].mxu0
        %361 = vmatprep.mubr.f32.mxu0 0.0
        %362 = vmatmul.mubr.f32.gmra.mrb[0].mxu0 %v290
        %v363 = vpop.f32.mrb[0].mxu0
        %v364 = vadd.f32 %v283, %v363
        %v365 = vpop.f32.mrb[0].mxu0
        %366 = vdwg.mxu0
        %v367 = vmul.f32 %v359, 0.35355338
        %v368 = vmul.f32 %v364, 0.35355338
        %371 = vrot.lane.b32.xlu0 %v359, 96
        %v372 = vpop.permute.xlu0 %371
        %373 = vrot.lane.b32.xlu0 %v364, 96
        %v374 = vpop.permute.xlu0 %373
        %vm375 = vcmask 64512
        %v377 = vsel %vm375, %v367, 0
        %v380 = vsel %vm375, %v368, 0
        %v382 = vsel %vm375, %v372, 0
        %v384 = vsel %vm375, %v374, 0
        %386 = vmatprep.subr.mxu0 0.0
        %387 = vmatpush1.xpose.msra.mxu0 %v382
        %388 = vmatprep.subr.mxu0 0.0
        %389 = vmatpush1.xpose.msra.mxu0 %v384
        %390 = vmatprep.subr.mxu0 0.0
        %391 = vmatpush1.xpose.msra.mxu0 0.0
        %392 = vmatprep.subr.mxu0 0.0
        %393 = vmatpush1.xpose.msra.mxu0 0.0
        %394 = vmatprep.subr.mxu0 0.0
        %395 = vmatpush1.xpose.msra.mxu0 0.0
        %396 = vmatprep.subr.mxu0 0.0
        %397 = vmatpush1.xpose.msra.mxu0 0.0
        %398 = vmatprep.subr.mxu0 0.0
        %399 = vmatpush1.xpose.msra.mxu0 0.0
        %400 = vmatprep.subr.mxu0 0.0
        %401 = vmatpush1.xpose.msra.mxu0 0.0
        %402 = vmatprep.subr.mxu0 0.0
        %403 = vmatpush1.xpose.msra.mxu0 0.0
        %404 = vmatprep.subr.mxu0 0.0
        %405 = vmatpush1.xpose.msra.mxu0 0.0
        %406 = vmatprep.subr.mxu0 0.0
        %407 = vmatpush1.xpose.msra.mxu0 0.0
        %408 = vmatprep.subr.mxu0 0.0
        %409 = vmatpush1.xpose.msra.mxu0 0.0
        %410 = vmatprep.subr.mxu0 0.0
        %411 = vmatpush1.xpose.msra.mxu0 0.0
        %412 = vmatprep.subr.mxu0 0.0
        %413 = vmatpush1.xpose.msra.mxu0 0.0
        %414 = vmatprep.subr.mxu0 0.0
        %415 = vmatpush1.xpose.msra.mxu0 0.0
        %416 = vmatprep.subr.mxu0 0.0
        %417 = vmatpush1.xpose.msra.mxu0 0.0
        %418 = vmatprep.subr.mxu0 0.0
        %419 = vmatpush1.xpose.msra.mxu0 0.0
        %420 = vmatprep.subr.mxu0 0.0
        %421 = vmatpush1.xpose.msra.mxu0 0.0
        %422 = vmatprep.subr.mxu0 0.0
        %423 = vmatpush1.xpose.msra.mxu0 0.0
        %424 = vmatprep.subr.mxu0 0.0
        %425 = vmatpush1.xpose.msra.mxu0 0.0
        %426 = vmatprep.subr.mxu0 0.0
        %427 = vmatpush1.xpose.msra.mxu0 0.0
        %428 = vmatprep.subr.mxu0 0.0
        %429 = vmatpush1.xpose.msra.mxu0 0.0
        %430 = vmatprep.subr.mxu0 0.0
        %431 = vmatpush1.xpose.msra.mxu0 0.0
        %432 = vmatprep.subr.mxu0 0.0
        %433 = vmatpush1.xpose.msra.mxu0 0.0
        %434 = vmatprep.subr.mxu0 0.0
        %435 = vmatpush1.xpose.msra.mxu0 0.0
        %436 = vmatprep.subr.mxu0 0.0
        %437 = vmatpush1.xpose.msra.mxu0 0.0
        %438 = vmatprep.subr.mxu0 0.0
        %439 = vmatpush1.xpose.msra.mxu0 0.0
        %440 = vmatprep.subr.mxu0 0.0
        %441 = vmatpush1.xpose.msra.mxu0 0.0
        %442 = vmatprep.subr.mxu0 0.0
        %443 = vmatpush1.xpose.msra.mxu0 0.0
        %444 = vmatprep.subr.mxu0 0.0
        %445 = vmatpush1.xpose.msra.mxu0 0.0
        %446 = vmatprep.subr.mxu0 0.0
        %447 = vmatpush1.xpose.msra.mxu0 0.0
        %448 = vmatprep.subr.mxu0 0.0
        %449 = vmatpush1.xpose.msra.mxu0 0.0
        %450 = vmatprep.mubr.f32.mxu0 0.0
        %451 = vmatmul.mubr.f32.gmra.mrb[0].mxu0 %v377
        %v452 = vpop.f32.mrb[0].mxu0
        %v453 = vadd.f32 0.0, %v452
        %v454 = vpop.f32.mrb[0].mxu0
        %455 = vmatprep.mubr.f32.mxu0 0.0
        %456 = vmatmul.mubr.f32.gmra.mrb[0].mxu0 %v380
        %v457 = vpop.f32.mrb[0].mxu0
        %v458 = vadd.f32 0.0, %v457
        %v459 = vpop.f32.mrb[0].mxu0
        %460 = vdwg.mxu0
        %vm461 = vcmask 130048
        %v462 = vsel %vm461, %v453, -inf
        %463 = vmax.xlane.f32.xlu0 %v462
        %v464 = vpop.xlane.xlu0 %463
        %v465 = vsel %vm461, %v458, -inf
        %466 = vmax.xlane.f32.xlu0 %v465
        %v467 = vpop.xlane.xlu0 %466
        %v468 = vsub.f32 %v453, %v464
        %v469 = vsub.f32 %v458, %v467
        %v470 = vmul.f32 %v468, 1.442695
        %v471 = vpow.pop %v470
        %v472 = vmul.f32 %v469, 1.442695
        %v473 = vpow.pop %v472
        %v474 = vsel %vm461, %v471, 0.0
        %475 = vadd.xlane.f32.xlu0 %v474
        %v476 = vpop.xlane.xlu0 %475
        %v477 = vsel %vm461, %v473, 0.0
        %478 = vadd.xlane.f32.xlu0 %v477
        %v479 = vpop.xlane.xlu0 %478
        %v480 = vrcp.pop %v476
        %v481 = vrcp.pop %v479
        %v482 = vmul.f32 %v471, %v480
        %v483 = vmul.f32 %v473, %v481
        %484 = vrot.lane.b32.xlu0 %v359, 64
        %v485 = vpop.permute.xlu0 %484
        %486 = vrot.lane.b32.xlu0 %v364, 64
        %v487 = vpop.permute.xlu0 %486
        %v491 = vsel %vm461, %v482, 0
        %v494 = vsel %vm461, %v483, 0
        %496 = vmatprep.subr.mxu0 0.0
        %497 = vmatpush1.msra.mxu0 %v485
        %498 = vmatprep.subr.mxu0 0.0
        %499 = vmatpush1.msra.mxu0 %v487
        %500 = vmatprep.subr.mxu0 0.0
        %501 = vmatpush1.msra.mxu0 0.0
        %502 = vmatprep.subr.mxu0 0.0
        %503 = vmatpush1.msra.mxu0 0.0
        %504 = vmatprep.subr.mxu0 0.0
        %505 = vmatpush1.msra.mxu0 0.0
        %506 = vmatprep.subr.mxu0 0.0
        %507 = vmatpush1.msra.mxu0 0.0
        %508 = vmatprep.subr.mxu0 0.0
        %509 = vmatpush1.msra.mxu0 0.0
        %510 = vmatprep.subr.mxu0 0.0
        %511 = vmatpush1.msra.mxu0 0.0
        %512 = vmatprep.subr.mxu0 0.0
        %513 = vmatpush1.msra.mxu0 0.0
        %514 = vmatprep.subr.mxu0 0.0
        %515 = vmatpush1.msra.mxu0 0.0
        %516 = vmatprep.subr.mxu0 0.0
        %517 = vmatpush1.msra.mxu0 0.0
        %518 = vmatprep.subr.mxu0 0.0
        %519 = vmatpush1.msra.mxu0 0.0
        %520 = vmatprep.subr.mxu0 0.0
        %521 = vmatpush1.msra.mxu0 0.0
        %522 = vmatprep.subr.mxu0 0.0
        %523 = vmatpush1.msra.mxu0 0.0
        %524 = vmatprep.subr.mxu0 0.0
        %525 = vmatpush1.msra.mxu0 0.0
        %526 = vmatprep.subr.mxu0 0.0
        %527 = vmatpush1.msra.mxu0 0.0
        %528 = vmatprep.subr.mxu0 0.0
        %529 = vmatpush1.msra.mxu0 0.0
        %530 = vmatprep.subr.mxu0 0.0
        %531 = vmatpush1.msra.mxu0 0.0
        %532 = vmatprep.subr.mxu0 0.0
        %533 = vmatpush1.msra.mxu0 0.0
        %534 = vmatprep.subr.mxu0 0.0
        %535 = vmatpush1.msra.mxu0 0.0
        %536 = vmatprep.subr.mxu0 0.0
        %537 = vmatpush1.msra.mxu0 0.0
        %538 = vmatprep.subr.mxu0 0.0
        %539 = vmatpush1.msra.mxu0 0.0
        %540 = vmatprep.subr.mxu0 0.0
        %541 = vmatpush1.msra.mxu0 0.0
        %542 = vmatprep.subr.mxu0 0.0
        %543 = vmatpush1.msra.mxu0 0.0
        %544 = vmatprep.subr.mxu0 0.0
        %545 = vmatpush1.msra.mxu0 0.0
        %546 = vmatprep.subr.mxu0 0.0
        %547 = vmatpush1.msra.mxu0 0.0
        %548 = vmatprep.subr.mxu0 0.0
        %549 = vmatpush1.msra.mxu0 0.0
        %550 = vmatprep.subr.mxu0 0.0
        %551 = vmatpush1.msra.mxu0 0.0
        %552 = vmatprep.subr.mxu0 0.0
        %553 = vmatpush1.msra.mxu0 0.0
        %554 = vmatprep.subr.mxu0 0.0
        %555 = vmatpush1.msra.mxu0 0.0
        %556 = vmatprep.subr.mxu0 0.0
        %557 = vmatpush1.msra.mxu0 0.0
        %558 = vmatprep.subr.mxu0 0.0
        %559 = vmatpush1.msra.mxu0 0.0
        %560 = vmatprep.mubr.f32.mxu0 0.0
        %561 = vmatmul.mubr.f32.gmra.mrb[0].mxu0 %v491
        %v562 = vpop.f32.mrb[0].mxu0
        %v563 = vadd.f32 0.0, %v562
        %v564 = vpop.f32.mrb[0].mxu0
        %565 = vmatprep.mubr.f32.mxu0 0.0
        %566 = vmatmul.mubr.f32.gmra.mrb[0].mxu0 %v494
        %v567 = vpop.f32.mrb[0].mxu0
        %v568 = vadd.f32 0.0, %v567
        %v569 = vpop.f32.mrb[0].mxu0
        %570 = vdwg.mxu0
        %571 = vrot.lane.b32.xlu0 %v367, 120
        %v572 = vpop.permute.xlu0 %571
        %573 = vrot.lane.b32.xlu0 %v368, 120
        %v574 = vpop.permute.xlu0 %573
        %575 = vrot.lane.b32.xlu0 %v359, 88
        %v576 = vpop.permute.xlu0 %575
        %577 = vrot.lane.b32.xlu0 %v364, 88
        %v578 = vpop.permute.xlu0 %577
        %v579 = vsel %vm375, %v572, 0
        %v581 = vsel %vm375, %v574, 0
        %v583 = vsel %vm375, %v576, 0
        %v585 = vsel %vm375, %v578, 0
        %587 = vmatprep.subr.mxu0 0.0
        %588 = vmatpush1.xpose.msra.mxu0 %v583
        %589 = vmatprep.subr.mxu0 0.0
        %590 = vmatpush1.xpose.msra.mxu0 %v585
        %591 = vmatprep.subr.mxu0 0.0
        %592 = vmatpush1.xpose.msra.mxu0 0.0
        %593 = vmatprep.subr.mxu0 0.0
        %594 = vmatpush1.xpose.msra.mxu0 0.0
        %595 = vmatprep.subr.mxu0 0.0
        %596 = vmatpush1.xpose.msra.mxu0 0.0
        %597 = vmatprep.subr.mxu0 0.0
        %598 = vmatpush1.xpose.msra.mxu0 0.0
        %599 = vmatprep.subr.mxu0 0.0
        %600 = vmatpush1.xpose.msra.mxu0 0.0
        %601 = vmatprep.subr.mxu0 0.0
        %602 = vmatpush1.xpose.msra.mxu0 0.0
        %603 = vmatprep.subr.mxu0 0.0
        %604 = vmatpush1.xpose.msra.mxu0 0.0
        %605 = vmatprep.subr.mxu0 0.0
        %606 = vmatpush1.xpose.msra.mxu0 0.0
        %607 = vmatprep.subr.mxu0 0.0
        %608 = vmatpush1.xpose.msra.mxu0 0.0
        %609 = vmatprep.subr.mxu0 0.0
        %610 = vmatpush1.xpose.msra.mxu0 0.0
        %611 = vmatprep.subr.mxu0 0.0
        %612 = vmatpush1.xpose.msra.mxu0 0.0
        %613 = vmatprep.subr.mxu0 0.0
        %614 = vmatpush1.xpose.msra.mxu0 0.0
        %615 = vmatprep.subr.mxu0 0.0
        %616 = vmatpush1.xpose.msra.mxu0 0.0
        %617 = vmatprep.subr.mxu0 0.0
        %618 = vmatpush1.xpose.msra.mxu0 0.0
        %619 = vmatprep.subr.mxu0 0.0
        %620 = vmatpush1.xpose.msra.mxu0 0.0
        %621 = vmatprep.subr.mxu0 0.0
        %622 = vmatpush1.xpose.msra.mxu0 0.0
        %623 = vmatprep.subr.mxu0 0.0
        %624 = vmatpush1.xpose.msra.mxu0 0.0
        %625 = vmatprep.subr.mxu0 0.0
        %626 = vmatpush1.xpose.msra.mxu0 0.0
        %627 = vmatprep.subr.mxu0 0.0
        %628 = vmatpush1.xpose.msra.mxu0 0.0
        %629 = vmatprep.subr.mxu0 0.0
        %630 = vmatpush1.xpose.msra.mxu0 0.0
        %631 = vmatprep.subr.mxu0 0.0
        %632 = vmatpush1.xpose.msra.mxu0 0.0
        %633 = vmatprep.subr.mxu0 0.0
        %634 = vmatpush1.xpose.msra.mxu0 0.0
        %635 = vmatprep.subr.mxu0 0.0
        %636 = vmatpush1.xpose.msra.mxu0 0.0
        %637 = vmatprep.subr.mxu0 0.0
        %638 = vmatpush1.xpose.msra.mxu0 0.0
        %639 = vmatprep.subr.mxu0 0.0
        %640 = vmatpush1.xpose.msra.mxu0 0.0
        %641 = vmatprep.subr.mxu0 0.0
        %642 = vmatpush1.xpose.msra.mxu0 0.0
        %643 = vmatprep.subr.mxu0 0.0
        %644 = vmatpush1.xpose.msra.mxu0 0.0
        %645 = vmatprep.subr.mxu0 0.0
        %646 = vmatpush1.xpose.msra.mxu0 0.0
        %647 = vmatprep.subr.mxu0 0.0
        %648 = vmatpush1.xpose.msra.mxu0 0.0
        %649 = vmatprep.subr.mxu0 0.0
        %650 = vmatpush1.xpose.msra.mxu0 0.0
        %651 = vmatprep.mubr.f32.mxu0 0.0
        %652 = vmatmul.mubr.f32.gmra.mrb[0].mxu0 %v579
        %v653 = vpop.f32.mrb[0].mxu0
        %v654 = vadd.f32 0.0, %v653
        %v655 = vpop.f32.mrb[0].mxu0
        %656 = vmatprep.mubr.f32.mxu0 0.0
        %657 = vmatmul.mubr.f32.gmra.mrb[0].mxu0 %v581
        %v658 = vpop.f32.mrb[0].mxu0
        %v659 = vadd.f32 0.0, %v658
        %v660 = vpop.f32.mrb[0].mxu0
        %661 = vdwg.mxu0
        %v662 = vsel %vm461, %v654, -inf
        %663 = vmax.xlane.f32.xlu0 %v662
        %v664 = vpop.xlane.xlu0 %663
        %v665 = vsel %vm461, %v659, -inf
        %666 = vmax.xlane.f32.xlu0 %v665
        %v667 = vpop.xlane.xlu0 %666
        %v668 = vsub.f32 %v654, %v664
        %v669 = vsub.f32 %v659, %v667
        %v670 = vmul.f32 %v668, 1.442695
        %v671 = vpow.pop %v670
        %v672 = vmul.f32 %v669, 1.442695
        %v673 = vpow.pop %v672
        %v674 = vsel %vm461, %v671, 0.0
        %675 = vadd.xlane.f32.xlu0 %v674
        %v676 = vpop.xlane.xlu0 %675
        %v677 = vsel %vm461, %v673, 0.0
        %678 = vadd.xlane.f32.xlu0 %v677
        %v679 = vpop.xlane.xlu0 %678
        %v680 = vrcp.pop %v676
        %v681 = vrcp.pop %v679
        %v682 = vmul.f32 %v671, %v680
        %v683 = vmul.f32 %v673, %v681
        %684 = vrot.lane.b32.xlu0 %v359, 56
        %v685 = vpop.permute.xlu0 %684
        %686 = vrot.lane.b32.xlu0 %v364, 56
        %v687 = vpop.permute.xlu0 %686
        %v691 = vsel %vm461, %v682, 0
        %v694 = vsel %vm461, %v683, 0
        %696 = vmatprep.subr.mxu0 0.0
        %697 = vmatpush1.msra.mxu0 %v685
        %698 = vmatprep.subr.mxu0 0.0
        %699 = vmatpush1.msra.mxu0 %v687
        %700 = vmatprep.subr.mxu0 0.0
        %701 = vmatpush1.msra.mxu0 0.0
        %702 = vmatprep.subr.mxu0 0.0
        %703 = vmatpush1.msra.mxu0 0.0
        %704 = vmatprep.subr.mxu0 0.0
        %705 = vmatpush1.msra.mxu0 0.0
        %706 = vmatprep.subr.mxu0 0.0
        %707 = vmatpush1.msra.mxu0 0.0
        %708 = vmatprep.subr.mxu0 0.0
        %709 = vmatpush1.msra.mxu0 0.0
        %710 = vmatprep.subr.mxu0 0.0
        %711 = vmatpush1.msra.mxu0 0.0
        %712 = vmatprep.subr.mxu0 0.0
        %713 = vmatpush1.msra.mxu0 0.0
        %714 = vmatprep.subr.mxu0 0.0
        %715 = vmatpush1.msra.mxu0 0.0
        %716 = vmatprep.subr.mxu0 0.0
        %717 = vmatpush1.msra.mxu0 0.0
        %718 = vmatprep.subr.mxu0 0.0
        %719 = vmatpush1.msra.mxu0 0.0
        %720 = vmatprep.subr.mxu0 0.0
        %721 = vmatpush1.msra.mxu0 0.0
        %722 = vmatprep.subr.mxu0 0.0
        %723 = vmatpush1.msra.mxu0 0.0
        %724 = vmatprep.subr.mxu0 0.0
        %725 = vmatpush1.msra.mxu0 0.0
        %726 = vmatprep.subr.mxu0 0.0
        %727 = vmatpush1.msra.mxu0 0.0
        %728 = vmatprep.subr.mxu0 0.0
        %729 = vmatpush1.msra.mxu0 0.0
        %730 = vmatprep.subr.mxu0 0.0
        %731 = vmatpush1.msra.mxu0 0.0
        %732 = vmatprep.subr.mxu0 0.0
        %733 = vmatpush1.msra.mxu0 0.0
        %734 = vmatprep.subr.mxu0 0.0
        %735 = vmatpush1.msra.mxu0 0.0
        %736 = vmatprep.subr.mxu0 0.0
        %737 = vmatpush1.msra.mxu0 0.0
        %738 = vmatprep.subr.mxu0 0.0
        %739 = vmatpush1.msra.mxu0 0.0
        %740 = vmatprep.subr.mxu0 0.0
        %741 = vmatpush1.msra.mxu0 0.0
        %742 = vmatprep.subr.mxu0 0.0
        %743 = vmatpush1.msra.mxu0 0.0
        %744 = vmatprep.subr.mxu0 0.0
        %745 = vmatpush1.msra.mxu0 0.0
        %746 = vmatprep.subr.mxu0 0.0
        %747 = vmatpush1.msra.mxu0 0.0
        %748 = vmatprep.subr.mxu0 0.0
        %749 = vmatpush1.msra.mxu0 0.0
        %750 = vmatprep.subr.mxu0 0.0
        %751 = vmatpush1.msra.mxu0 0.0
        %752 = vmatprep.subr.mxu0 0.0
        %753 = vmatpush1.msra.mxu0 0.0
        %754 = vmatprep.subr.mxu0 0.0
        %755 = vmatpush1.msra.mxu0 0.0
        %756 = vmatprep.subr.mxu0 0.0
        %757 = vmatpush1.msra.mxu0 0.0
        %758 = vmatprep.subr.mxu0 0.0
        %759 = vmatpush1.msra.mxu0 0.0
        %760 = vmatprep.mubr.f32.mxu0 0.0
        %761 = vmatmul.mubr.f32.gmra.mrb[0].mxu0 %v691
        %v762 = vpop.f32.mrb[0].mxu0
        %v763 = vadd.f32 0.0, %v762
        %v764 = vpop.f32.mrb[0].mxu0
        %765 = vmatprep.mubr.f32.mxu0 0.0
        %766 = vmatmul.mubr.f32.gmra.mrb[0].mxu0 %v694
        %v767 = vpop.f32.mrb[0].mxu0
        %v768 = vadd.f32 0.0, %v767
        %v769 = vpop.f32.mrb[0].mxu0
        %770 = vdwg.mxu0
        %771 = vrot.lane.b32.xlu0 %v367, 112
        %v772 = vpop.permute.xlu0 %771
        %773 = vrot.lane.b32.xlu0 %v368, 112
        %v774 = vpop.permute.xlu0 %773
        %775 = vrot.lane.b32.xlu0 %v359, 80
        %v776 = vpop.permute.xlu0 %775
        %777 = vrot.lane.b32.xlu0 %v364, 80
        %v778 = vpop.permute.xlu0 %777
        %v779 = vsel %vm375, %v772, 0
        %v781 = vsel %vm375, %v774, 0
        %v783 = vsel %vm375, %v776, 0
        %v785 = vsel %vm375, %v778, 0
        %787 = vmatprep.subr.mxu0 0.0
        %788 = vmatpush1.xpose.msra.mxu0 %v783
        %789 = vmatprep.subr.mxu0 0.0
        %790 = vmatpush1.xpose.msra.mxu0 %v785
        %791 = vmatprep.subr.mxu0 0.0
        %792 = vmatpush1.xpose.msra.mxu0 0.0
        %793 = vmatprep.subr.mxu0 0.0
        %794 = vmatpush1.xpose.msra.mxu0 0.0
        %795 = vmatprep.subr.mxu0 0.0
        %796 = vmatpush1.xpose.msra.mxu0 0.0
        %797 = vmatprep.subr.mxu0 0.0
        %798 = vmatpush1.xpose.msra.mxu0 0.0
        %799 = vmatprep.subr.mxu0 0.0
        %800 = vmatpush1.xpose.msra.mxu0 0.0
        %801 = vmatprep.subr.mxu0 0.0
        %802 = vmatpush1.xpose.msra.mxu0 0.0
        %803 = vmatprep.subr.mxu0 0.0
        %804 = vmatpush1.xpose.msra.mxu0 0.0
        %805 = vmatprep.subr.mxu0 0.0
        %806 = vmatpush1.xpose.msra.mxu0 0.0
        %807 = vmatprep.subr.mxu0 0.0
        %808 = vmatpush1.xpose.msra.mxu0 0.0
        %809 = vmatprep.subr.mxu0 0.0
        %810 = vmatpush1.xpose.msra.mxu0 0.0
        %811 = vmatprep.subr.mxu0 0.0
        %812 = vmatpush1.xpose.msra.mxu0 0.0
        %813 = vmatprep.subr.mxu0 0.0
        %814 = vmatpush1.xpose.msra.mxu0 0.0
        %815 = vmatprep.subr.mxu0 0.0
        %816 = vmatpush1.xpose.msra.mxu0 0.0
        %817 = vmatprep.subr.mxu0 0.0
        %818 = vmatpush1.xpose.msra.mxu0 0.0
        %819 = vmatprep.subr.mxu0 0.0
        %820 = vmatpush1.xpose.msra.mxu0 0.0
        %821 = vmatprep.subr.mxu0 0.0
        %822 = vmatpush1.xpose.msra.mxu0 0.0
        %823 = vmatprep.subr.mxu0 0.0
        %824 = vmatpush1.xpose.msra.mxu0 0.0
        %825 = vmatprep.subr.mxu0 0.0
        %826 = vmatpush1.xpose.msra.mxu0 0.0
        %827 = vmatprep.subr.mxu0 0.0
        %828 = vmatpush1.xpose.msra.mxu0 0.0
        %829 = vmatprep.subr.mxu0 0.0
        %830 = vmatpush1.xpose.msra.mxu0 0.0
        %831 = vmatprep.subr.mxu0 0.0
        %832 = vmatpush1.xpose.msra.mxu0 0.0
        %833 = vmatprep.subr.mxu0 0.0
        %834 = vmatpush1.xpose.msra.mxu0 0.0
        %835 = vmatprep.subr.mxu0 0.0
        %836 = vmatpush1.xpose.msra.mxu0 0.0
        %837 = vmatprep.subr.mxu0 0.0
        %838 = vmatpush1.xpose.msra.mxu0 0.0
        %839 = vmatprep.subr.mxu0 0.0
        %840 = vmatpush1.xpose.msra.mxu0 0.0
        %841 = vmatprep.subr.mxu0 0.0
        %842 = vmatpush1.xpose.msra.mxu0 0.0
        %843 = vmatprep.subr.mxu0 0.0
        %844 = vmatpush1.xpose.msra.mxu0 0.0
        %845 = vmatprep.subr.mxu0 0.0
        %846 = vmatpush1.xpose.msra.mxu0 0.0
        %847 = vmatprep.subr.mxu0 0.0
        %848 = vmatpush1.xpose.msra.mxu0 0.0
        %849 = vmatprep.subr.mxu0 0.0
        %850 = vmatpush1.xpose.msra.mxu0 0.0
        %851 = vmatprep.mubr.f32.mxu0 0.0
        %852 = vmatmul.mubr.f32.gmra.mrb[0].mxu0 %v779
        %v853 = vpop.f32.mrb[0].mxu0
        %v854 = vadd.f32 0.0, %v853
        %v855 = vpop.f32.mrb[0].mxu0
        %856 = vmatprep.mubr.f32.mxu0 0.0
        %857 = vmatmul.mubr.f32.gmra.mrb[0].mxu0 %v781
        %v858 = vpop.f32.mrb[0].mxu0
        %v859 = vadd.f32 0.0, %v858
        %v860 = vpop.f32.mrb[0].mxu0
        %861 = vdwg.mxu0
        %v862 = vsel %vm461, %v854, -inf
        %863 = vmax.xlane.f32.xlu0 %v862
        %v864 = vpop.xlane.xlu0 %863
        %v865 = vsel %vm461, %v859, -inf
        %866 = vmax.xlane.f32.xlu0 %v865
        %v867 = vpop.xlane.xlu0 %866
        %v868 = vsub.f32 %v854, %v864
        %v869 = vsub.f32 %v859, %v867
        %v870 = vmul.f32 %v868, 1.442695
        %v871 = vpow.pop %v870
        %v872 = vmul.f32 %v869, 1.442695
        %v873 = vpow.pop %v872
        %v874 = vsel %vm461, %v871, 0.0
        %875 = vadd.xlane.f32.xlu0 %v874
        %v876 = vpop.xlane.xlu0 %875
        %v877 = vsel %vm461, %v873, 0.0
        %878 = vadd.xlane.f32.xlu0 %v877
        %v879 = vpop.xlane.xlu0 %878
        %v880 = vrcp.pop %v876
        %v881 = vrcp.pop %v879
        %v882 = vmul.f32 %v871, %v880
        %v883 = vmul.f32 %v873, %v881
        %884 = vrot.lane.b32.xlu0 %v359, 48
        %v885 = vpop.permute.xlu0 %884
        %886 = vrot.lane.b32.xlu0 %v364, 48
        %v887 = vpop.permute.xlu0 %886
        %v891 = vsel %vm461, %v882, 0
        %v894 = vsel %vm461, %v883, 0
        %896 = vmatprep.subr.mxu0 0.0
        %897 = vmatpush1.msra.mxu0 %v885
        %898 = vmatprep.subr.mxu0 0.0
        %899 = vmatpush1.msra.mxu0 %v887
        %900 = vmatprep.subr.mxu0 0.0
        %901 = vmatpush1.msra.mxu0 0.0
        %902 = vmatprep.subr.mxu0 0.0
        %903 = vmatpush1.msra.mxu0 0.0
        %904 = vmatprep.subr.mxu0 0.0
        %905 = vmatpush1.msra.mxu0 0.0
        %906 = vmatprep.subr.mxu0 0.0
        %907 = vmatpush1.msra.mxu0 0.0
        %908 = vmatprep.subr.mxu0 0.0
        %909 = vmatpush1.msra.mxu0 0.0
        %910 = vmatprep.subr.mxu0 0.0
        %911 = vmatpush1.msra.mxu0 0.0
        %912 = vmatprep.subr.mxu0 0.0
        %913 = vmatpush1.msra.mxu0 0.0
        %914 = vmatprep.subr.mxu0 0.0
        %915 = vmatpush1.msra.mxu0 0.0
        %916 = vmatprep.subr.mxu0 0.0
        %917 = vmatpush1.msra.mxu0 0.0
        %918 = vmatprep.subr.mxu0 0.0
        %919 = vmatpush1.msra.mxu0 0.0
        %920 = vmatprep.subr.mxu0 0.0
        %921 = vmatpush1.msra.mxu0 0.0
        %922 = vmatprep.subr.mxu0 0.0
        %923 = vmatpush1.msra.mxu0 0.0
        %924 = vmatprep.subr.mxu0 0.0
        %925 = vmatpush1.msra.mxu0 0.0
        %926 = vmatprep.subr.mxu0 0.0
        %927 = vmatpush1.msra.mxu0 0.0
        %928 = vmatprep.subr.mxu0 0.0
        %929 = vmatpush1.msra.mxu0 0.0
        %930 = vmatprep.subr.mxu0 0.0
        %931 = vmatpush1.msra.mxu0 0.0
        %932 = vmatprep.subr.mxu0 0.0
        %933 = vmatpush1.msra.mxu0 0.0
        %934 = vmatprep.subr.mxu0 0.0
        %935 = vmatpush1.msra.mxu0 0.0
        %936 = vmatprep.subr.mxu0 0.0
        %937 = vmatpush1.msra.mxu0 0.0
        %938 = vmatprep.subr.mxu0 0.0
        %939 = vmatpush1.msra.mxu0 0.0
        %940 = vmatprep.subr.mxu0 0.0
        %941 = vmatpush1.msra.mxu0 0.0
        %942 = vmatprep.subr.mxu0 0.0
        %943 = vmatpush1.msra.mxu0 0.0
        %944 = vmatprep.subr.mxu0 0.0
        %945 = vmatpush1.msra.mxu0 0.0
        %946 = vmatprep.subr.mxu0 0.0
        %947 = vmatpush1.msra.mxu0 0.0
        %948 = vmatprep.subr.mxu0 0.0
        %949 = vmatpush1.msra.mxu0 0.0
        %950 = vmatprep.subr.mxu0 0.0
        %951 = vmatpush1.msra.mxu0 0.0
        %952 = vmatprep.subr.mxu0 0.0
        %953 = vmatpush1.msra.mxu0 0.0
        %954 = vmatprep.subr.mxu0 0.0
        %955 = vmatpush1.msra.mxu0 0.0
        %956 = vmatprep.subr.mxu0 0.0
        %957 = vmatpush1.msra.mxu0 0.0
        %958 = vmatprep.subr.mxu0 0.0
        %959 = vmatpush1.msra.mxu0 0.0
        %960 = vmatprep.mubr.f32.mxu0 0.0
        %961 = vmatmul.mubr.f32.gmra.mrb[0].mxu0 %v891
        %v962 = vpop.f32.mrb[0].mxu0
        %v963 = vadd.f32 0.0, %v962
        %v964 = vpop.f32.mrb[0].mxu0
        %965 = vmatprep.mubr.f32.mxu0 0.0
        %966 = vmatmul.mubr.f32.gmra.mrb[0].mxu0 %v894
        %v967 = vpop.f32.mrb[0].mxu0
        %v968 = vadd.f32 0.0, %v967
        %v969 = vpop.f32.mrb[0].mxu0
        %970 = vdwg.mxu0
        %971 = vrot.lane.b32.xlu0 %v367, 104
        %v972 = vpop.permute.xlu0 %971
        %973 = vrot.lane.b32.xlu0 %v368, 104
        %v974 = vpop.permute.xlu0 %973
        %975 = vrot.lane.b32.xlu0 %v359, 72
        %v976 = vpop.permute.xlu0 %975
        %977 = vrot.lane.b32.xlu0 %v364, 72
        %v978 = vpop.permute.xlu0 %977
        %v979 = vsel %vm375, %v972, 0
        %v981 = vsel %vm375, %v974, 0
        %v983 = vsel %vm375, %v976, 0
        %v985 = vsel %vm375, %v978, 0
        %987 = vmatprep.subr.mxu0 0.0
        %988 = vmatpush1.xpose.msra.mxu0 %v983
        %989 = vmatprep.subr.mxu0 0.0
        %990 = vmatpush1.xpose.msra.mxu0 %v985
        %991 = vmatprep.subr.mxu0 0.0
        %992 = vmatpush1.xpose.msra.mxu0 0.0
        %993 = vmatprep.subr.mxu0 0.0
        %994 = vmatpush1.xpose.msra.mxu0 0.0
        %995 = vmatprep.subr.mxu0 0.0
        %996 = vmatpush1.xpose.msra.mxu0 0.0
        %997 = vmatprep.subr.mxu0 0.0
        %998 = vmatpush1.xpose.msra.mxu0 0.0
        %999 = vmatprep.subr.mxu0 0.0
        %1000 = vmatpush1.xpose.msra.mxu0 0.0
        %1001 = vmatprep.subr.mxu0 0.0
        %1002 = vmatpush1.xpose.msra.mxu0 0.0
        %1003 = vmatprep.subr.mxu0 0.0
        %1004 = vmatpush1.xpose.msra.mxu0 0.0
        %1005 = vmatprep.subr.mxu0 0.0
        %1006 = vmatpush1.xpose.msra.mxu0 0.0
        %1007 = vmatprep.subr.mxu0 0.0
        %1008 = vmatpush1.xpose.msra.mxu0 0.0
        %1009 = vmatprep.subr.mxu0 0.0
        %1010 = vmatpush1.xpose.msra.mxu0 0.0
        %1011 = vmatprep.subr.mxu0 0.0
        %1012 = vmatpush1.xpose.msra.mxu0 0.0
        %1013 = vmatprep.subr.mxu0 0.0
        %1014 = vmatpush1.xpose.msra.mxu0 0.0
        %1015 = vmatprep.subr.mxu0 0.0
        %1016 = vmatpush1.xpose.msra.mxu0 0.0
        %1017 = vmatprep.subr.mxu0 0.0
        %1018 = vmatpush1.xpose.msra.mxu0 0.0
        %1019 = vmatprep.subr.mxu0 0.0
        %1020 = vmatpush1.xpose.msra.mxu0 0.0
        %1021 = vmatprep.subr.mxu0 0.0
        %1022 = vmatpush1.xpose.msra.mxu0 0.0
        %1023 = vmatprep.subr.mxu0 0.0
        %1024 = vmatpush1.xpose.msra.mxu0 0.0
        %1025 = vmatprep.subr.mxu0 0.0
        %1026 = vmatpush1.xpose.msra.mxu0 0.0
        %1027 = vmatprep.subr.mxu0 0.0
        %1028 = vmatpush1.xpose.msra.mxu0 0.0
        %1029 = vmatprep.subr.mxu0 0.0
        %1030 = vmatpush1.xpose.msra.mxu0 0.0
        %1031 = vmatprep.subr.mxu0 0.0
        %1032 = vmatpush1.xpose.msra.mxu0 0.0
        %1033 = vmatprep.subr.mxu0 0.0
        %1034 = vmatpush1.xpose.msra.mxu0 0.0
        %1035 = vmatprep.subr.mxu0 0.0
        %1036 = vmatpush1.xpose.msra.mxu0 0.0
        %1037 = vmatprep.subr.mxu0 0.0
        %1038 = vmatpush1.xpose.msra.mxu0 0.0
        %1039 = vmatprep.subr.mxu0 0.0
        %1040 = vmatpush1.xpose.msra.mxu0 0.0
        %1041 = vmatprep.subr.mxu0 0.0
        %1042 = vmatpush1.xpose.msra.mxu0 0.0
        %1043 = vmatprep.subr.mxu0 0.0
        %1044 = vmatpush1.xpose.msra.mxu0 0.0
        %1045 = vmatprep.subr.mxu0 0.0
        %1046 = vmatpush1.xpose.msra.mxu0 0.0
        %1047 = vmatprep.subr.mxu0 0.0
        %1048 = vmatpush1.xpose.msra.mxu0 0.0
        %1049 = vmatprep.subr.mxu0 0.0
        %1050 = vmatpush1.xpose.msra.mxu0 0.0
        %1051 = vmatprep.mubr.f32.mxu0 0.0
        %1052 = vmatmul.mubr.f32.gmra.mrb[0].mxu0 %v979
        %v1053 = vpop.f32.mrb[0].mxu0
        %v1054 = vadd.f32 0.0, %v1053
        %v1055 = vpop.f32.mrb[0].mxu0
        %1056 = vmatprep.mubr.f32.mxu0 0.0
        %1057 = vmatmul.mubr.f32.gmra.mrb[0].mxu0 %v981
        %v1058 = vpop.f32.mrb[0].mxu0
        %v1059 = vadd.f32 0.0, %v1058
        %v1060 = vpop.f32.mrb[0].mxu0
        %1061 = vdwg.mxu0
        %v1062 = vsel %vm461, %v1054, -inf
        %1063 = vmax.xlane.f32.xlu0 %v1062
        %v1064 = vpop.xlane.xlu0 %1063
        %v1065 = vsel %vm461, %v1059, -inf
        %1066 = vmax.xlane.f32.xlu0 %v1065
        %v1067 = vpop.xlane.xlu0 %1066
        %v1068 = vsub.f32 %v1054, %v1064
        %v1069 = vsub.f32 %v1059, %v1067
        %v1070 = vmul.f32 %v1068, 1.442695
        %v1071 = vpow.pop %v1070
        %v1072 = vmul.f32 %v1069, 1.442695
        %v1073 = vpow.pop %v1072
        %v1074 = vsel %vm461, %v1071, 0.0
        %1075 = vadd.xlane.f32.xlu0 %v1074
        %v1076 = vpop.xlane.xlu0 %1075
        %v1077 = vsel %vm461, %v1073, 0.0
        %1078 = vadd.xlane.f32.xlu0 %v1077
        %v1079 = vpop.xlane.xlu0 %1078
        %v1080 = vrcp.pop %v1076
        %v1081 = vrcp.pop %v1079
        %v1082 = vmul.f32 %v1071, %v1080
        %v1083 = vmul.f32 %v1073, %v1081
        %1084 = vrot.lane.b32.xlu0 %v359, 40
        %v1085 = vpop.permute.xlu0 %1084
        %1086 = vrot.lane.b32.xlu0 %v364, 40
        %v1087 = vpop.permute.xlu0 %1086
        %v1091 = vsel %vm461, %v1082, 0
        %v1094 = vsel %vm461, %v1083, 0
        %1096 = vmatprep.subr.mxu0 0.0
        %1097 = vmatpush1.msra.mxu0 %v1085
        %1098 = vmatprep.subr.mxu0 0.0
        %1099 = vmatpush1.msra.mxu0 %v1087
        %1100 = vmatprep.subr.mxu0 0.0
        %1101 = vmatpush1.msra.mxu0 0.0
        %1102 = vmatprep.subr.mxu0 0.0
        %1103 = vmatpush1.msra.mxu0 0.0
        %1104 = vmatprep.subr.mxu0 0.0
        %1105 = vmatpush1.msra.mxu0 0.0
        %1106 = vmatprep.subr.mxu0 0.0
        %1107 = vmatpush1.msra.mxu0 0.0
        %1108 = vmatprep.subr.mxu0 0.0
        %1109 = vmatpush1.msra.mxu0 0.0
        %1110 = vmatprep.subr.mxu0 0.0
        %1111 = vmatpush1.msra.mxu0 0.0
        %1112 = vmatprep.subr.mxu0 0.0
        %1113 = vmatpush1.msra.mxu0 0.0
        %1114 = vmatprep.subr.mxu0 0.0
        %1115 = vmatpush1.msra.mxu0 0.0
        %1116 = vmatprep.subr.mxu0 0.0
        %1117 = vmatpush1.msra.mxu0 0.0
        %1118 = vmatprep.subr.mxu0 0.0
        %1119 = vmatpush1.msra.mxu0 0.0
        %1120 = vmatprep.subr.mxu0 0.0
        %1121 = vmatpush1.msra.mxu0 0.0
        %1122 = vmatprep.subr.mxu0 0.0
        %1123 = vmatpush1.msra.mxu0 0.0
        %1124 = vmatprep.subr.mxu0 0.0
        %1125 = vmatpush1.msra.mxu0 0.0
        %1126 = vmatprep.subr.mxu0 0.0
        %1127 = vmatpush1.msra.mxu0 0.0
        %1128 = vmatprep.subr.mxu0 0.0
        %1129 = vmatpush1.msra.mxu0 0.0
        %1130 = vmatprep.subr.mxu0 0.0
        %1131 = vmatpush1.msra.mxu0 0.0
        %1132 = vmatprep.subr.mxu0 0.0
        %1133 = vmatpush1.msra.mxu0 0.0
        %1134 = vmatprep.subr.mxu0 0.0
        %1135 = vmatpush1.msra.mxu0 0.0
        %1136 = vmatprep.subr.mxu0 0.0
        %1137 = vmatpush1.msra.mxu0 0.0
        %1138 = vmatprep.subr.mxu0 0.0
        %1139 = vmatpush1.msra.mxu0 0.0
        %1140 = vmatprep.subr.mxu0 0.0
        %1141 = vmatpush1.msra.mxu0 0.0
        %1142 = vmatprep.subr.mxu0 0.0
        %1143 = vmatpush1.msra.mxu0 0.0
        %1144 = vmatprep.subr.mxu0 0.0
        %1145 = vmatpush1.msra.mxu0 0.0
        %1146 = vmatprep.subr.mxu0 0.0
        %1147 = vmatpush1.msra.mxu0 0.0
        %1148 = vmatprep.subr.mxu0 0.0
        %1149 = vmatpush1.msra.mxu0 0.0
        %1150 = vmatprep.subr.mxu0 0.0
        %1151 = vmatpush1.msra.mxu0 0.0
        %1152 = vmatprep.subr.mxu0 0.0
        %1153 = vmatpush1.msra.mxu0 0.0
        %1154 = vmatprep.subr.mxu0 0.0
        %1155 = vmatpush1.msra.mxu0 0.0
        %1156 = vmatprep.subr.mxu0 0.0
        %1157 = vmatpush1.msra.mxu0 0.0
        %1158 = vmatprep.subr.mxu0 0.0
        %1159 = vmatpush1.msra.mxu0 0.0
        %1160 = vmatprep.mubr.f32.mxu0 0.0
        %1161 = vmatmul.mubr.f32.gmra.mrb[0].mxu0 %v1091
        %v1162 = vpop.f32.mrb[0].mxu0
        %v1163 = vadd.f32 0.0, %v1162
        %v1164 = vpop.f32.mrb[0].mxu0
        %1165 = vmatprep.mubr.f32.mxu0 0.0
        %1166 = vmatmul.mubr.f32.gmra.mrb[0].mxu0 %v1094
        %v1167 = vpop.f32.mrb[0].mxu0
        %v1168 = vadd.f32 0.0, %v1167
        %v1169 = vpop.f32.mrb[0].mxu0
        %1170 = vdwg.mxu0
        %1173 = vrot.lane.b32.xlu0 %v763, 8
        %v1174 = vpop.permute.xlu0 %1173
        %1175 = vrot.lane.b32.xlu0 %v768, 8
        %v1176 = vpop.permute.xlu0 %1175
        %1181 = vrot.lane.b32.xlu0 %v963, 16
        %v1182 = vpop.permute.xlu0 %1181
        %1183 = vrot.lane.b32.xlu0 %v968, 16
        %v1184 = vpop.permute.xlu0 %1183
        %1189 = vrot.lane.b32.xlu0 %v1163, 24
        %v1190 = vpop.permute.xlu0 %1189
        %1191 = vrot.lane.b32.xlu0 %v1168, 24
        %v1192 = vpop.permute.xlu0 %1191
        %v1195 = vsel %vm375, %v563, %v1174
        %v1196 = vsel %vm375, %v568, %v1176
        %v1197 = vsel %vm461, %v1195, %v1182
        %v1198 = vsel %vm461, %v1196, %v1184
        %vm1199 = vcmask 195584
        %v1200 = vsel %vm1199, %v1197, %v1190
        %v1201 = vsel %vm1199, %v1198, %v1192
        %v1202 = vld [vmem:[#allocation7] sm:$0xff]
        %v1203 = vld [vmem:[#allocation7 + $0x8] sm:$0xff]
        %v1204 = vld [vmem:[#allocation7 + $0x10] sm:$0xff]
        %v1205 = vld [vmem:[#allocation7 + $0x18] sm:$0xff]
        %v1206 = vld [vmem:[%s4] sm:$0x1]
        %v1208 = vlaneseq
        %v1209 = vshrl.u32 %v1208, 7
        %v1210 = vsub.s32 0, %v1209
        %v1211 = vrot.slane %v1206, %v1210
        %v1214 = vsel %vm285, %v1200, 0
        %v1217 = vsel %vm285, %v1201, 0
        %1219 = vmatprep.subr.mxu0 0.0
        %1220 = vmatpush1.msra.mxu0 %v1202
        %1221 = vmatprep.subr.mxu0 0.0
        %1222 = vmatpush1.msra.mxu0 %v1203
        %1223 = vmatprep.subr.mxu0 0.0
        %1224 = vmatpush1.msra.mxu0 %v1204
        %1225 = vmatprep.subr.mxu0 0.0
        %1226 = vmatpush1.msra.mxu0 %v1205
        %1227 = vmatprep.subr.mxu0 0.0
        %1228 = vmatpush1.msra.mxu0 0.0
        %1229 = vmatprep.subr.mxu0 0.0
        %1230 = vmatpush1.msra.mxu0 0.0
        %1231 = vmatprep.subr.mxu0 0.0
        %1232 = vmatpush1.msra.mxu0 0.0
        %1233 = vmatprep.subr.mxu0 0.0
        %1234 = vmatpush1.msra.mxu0 0.0
        %1235 = vmatprep.subr.mxu0 0.0
        %1236 = vmatpush1.msra.mxu0 0.0
        %1237 = vmatprep.subr.mxu0 0.0
        %1238 = vmatpush1.msra.mxu0 0.0
        %1239 = vmatprep.subr.mxu0 0.0
        %1240 = vmatpush1.msra.mxu0 0.0
        %1241 = vmatprep.subr.mxu0 0.0
        %1242 = vmatpush1.msra.mxu0 0.0
        %1243 = vmatprep.subr.mxu0 0.0
        %1244 = vmatpush1.msra.mxu0 0.0
        %1245 = vmatprep.subr.mxu0 0.0
        %1246 = vmatpush1.msra.mxu0 0.0
        %1247 = vmatprep.subr.mxu0 0.0
        %1248 = vmatpush1.msra.mxu0 0.0
        %1249 = vmatprep.subr.mxu0 0.0
        %1250 = vmatpush1.msra.mxu0 0.0
        %1251 = vmatprep.subr.mxu0 0.0
        %1252 = vmatpush1.msra.mxu0 0.0
        %1253 = vmatprep.subr.mxu0 0.0
        %1254 = vmatpush1.msra.mxu0 0.0
        %1255 = vmatprep.subr.mxu0 0.0
        %1256 = vmatpush1.msra.mxu0 0.0
        %1257 = vmatprep.subr.mxu0 0.0
        %1258 = vmatpush1.msra.mxu0 0.0
        %1259 = vmatprep.subr.mxu0 0.0
        %1260 = vmatpush1.msra.mxu0 0.0
        %1261 = vmatprep.subr.mxu0 0.0
        %1262 = vmatpush1.msra.mxu0 0.0
        %1263 = vmatprep.subr.mxu0 0.0
        %1264 = vmatpush1.msra.mxu0 0.0
        %1265 = vmatprep.subr.mxu0 0.0
        %1266 = vmatpush1.msra.mxu0 0.0
        %1267 = vmatprep.subr.mxu0 0.0
        %1268 = vmatpush1.msra.mxu0 0.0
        %1269 = vmatprep.subr.mxu0 0.0
        %1270 = vmatpush1.msra.mxu0 0.0
        %1271 = vmatprep.subr.mxu0 0.0
        %1272 = vmatpush1.msra.mxu0 0.0
        %1273 = vmatprep.subr.mxu0 0.0
        %1274 = vmatpush1.msra.mxu0 0.0
        %1275 = vmatprep.subr.mxu0 0.0
        %1276 = vmatpush1.msra.mxu0 0.0
        %1277 = vmatprep.subr.mxu0 0.0
        %1278 = vmatpush1.msra.mxu0 0.0
        %1279 = vmatprep.subr.mxu0 0.0
        %1280 = vmatpush1.msra.mxu0 0.0
        %1281 = vmatprep.subr.mxu0 0.0
        %1282 = vmatpush1.msra.mxu0 0.0
        %1283 = vmatprep.mubr.f32.mxu0 0.0
        %1284 = vmatmul.mubr.f32.gmra.mrb[0].mxu0 %v1214
        %v1285 = vpop.f32.mrb[0].mxu0
        %v1286 = vadd.f32 %v1211, %v1285
        %v1287 = vpop.f32.mrb[0].mxu0
        %1288 = vmatprep.mubr.f32.mxu0 0.0
        %1289 = vmatmul.mubr.f32.gmra.mrb[0].mxu0 %v1217
        %v1290 = vpop.f32.mrb[0].mxu0
        %v1291 = vadd.f32 %v1211, %v1290
        %v1292 = vpop.f32.mrb[0].mxu0
        %1293 = vdwg.mxu0
        %1294 = vst.msk [vmem:[%s271] sm:$0xff] %vm285, %v1286
        %1295 = vst.msk [vmem:[%s271 + $0x8] sm:$0xff] %vm285, %v1291
        %s1296 = sand.u32 %s141, 1
        %s1297 = scalar_lea.sflag [#allocation4], %s1296
        %s1298 = sand.u32 %s141, 1
        %s1299 = smul.addr %s1298, 16
        %s1300 = scalar_lea.vmem [#allocation8], %s1299
        // Predicated region
        $region53: #{tpu_custom_call.1} parent=39 // pred_check
          %p1301 = pneg %p151
        $region54: #{tpu_custom_call.1} parent=39 // pred_check_branch
          %1303 = sbr.rel (%p1301) target = $region56
        $region55: #{tpu_custom_call.1} parent=39 // pred_region
          %s1305 = ssub.s32 256, 256
          %1306 = vsyncadd %s1297, %s1305
          %s1307 = smul.addr %s23, 2
          %s1308 = smul.addr %s1307, 128
          %s1309 = scalar_lea.hbm %s5, %s1308
          %s1310 = sshll.u32 %s1300, 4
          %s1311 = int_to_ptr.vmem [resolvable:$true] %s1310
          %1316 = dma.vmem_to_hbm [thread:$0]  %s1311, 256, %s1309, %s1297, 128, 128, 8
        $region56: #{tpu_custom_call.1} parent=39 // pred_fallthru
          _
      $region40: #{tpu_custom_call.1} parent=5 // pred_fallthru
        _
      %p1317 = scmp.le.s32.totalorder 2, %s18
      // Predicated region
      $region57: #{tpu_custom_call.1} parent=5 // pred_check
        %p1318 = pneg %p1317
      $region58: #{tpu_custom_call.1} parent=5 // pred_check_branch
        %1320 = sbr.rel (%p1318) target = $region60
      $region59: #{tpu_custom_call.1} parent=5 // pred_region
        %s1321 = ssub.s32 %s18, 2
        // Predicated region
        $region61: #{tpu_custom_call.1} parent=59 // pred_check
          %p1322 = pneg %p157
        $region62: #{tpu_custom_call.1} parent=59 // pred_check_branch
          %1324 = sbr.rel (%p1322) target = $region64
        $region63: #{tpu_custom_call.1} parent=59 // pred_region
          %s1325 = sand.u32 %s142, 1
          %s1326 = scalar_lea.sflag [#allocation4], %s1325
          %s1327 = sand.u32 %s142, 1
          %s1328 = smul.addr %s1327, 16
          %s1329 = scalar_lea.vmem [#allocation8], %s1328
          %1330 = dma.done %s1326, 256
        $region64: #{tpu_custom_call.1} parent=59 // pred_fallthru
          _
      $region60: #{tpu_custom_call.1} parent=5 // pred_fallthru
        _
    $region6: #{tpu_custom_call.1} parent=1 // loop_footer
      %s22 = sadd.s32 1, %s18
    $region7: #{tpu_custom_call.1} parent=1 // loop_footer_branch
      %17 = sbr.rel target = $region3
    $region8: #{tpu_custom_call.1} parent=1 // loop_exit
      _
    %1331 = vsyncpa [#allocation3], 1
    %s1332 = scalar_lea.sflag [#allocation3], 1
    %1333 = vsyncpa %s1332, 1
    %1334 = vsyncpa [#allocation6], 1
    %1335 = vsyncpa [#allocation4], 1
    %s1336 = scalar_lea.sflag [#allocation4], 1
    %1337 = vsyncpa %s1336, 1

</llo_original>
